<compile_context>
chip_gen: v6e
topology: v6e:2x2x1
jax: 0.10.0
libtpu: 0.0.40
codegen_flags: <defaults>
</compile_context>

<pallas_src>
import numpy as np
import jax
import jax.numpy as jnp
from jax.experimental import pallas as pl
from jax.experimental.pallas import tpu as pltpu

HIDDEN = 128        # hidden_size
FEAT = 4            # input_feaure
NUM_LAYERS = 10     # input_length (used as num_layers in the PyTorch module)


def _lstm_kernel(x_ref, wih_ref, whh_ref, b_ref, fcw_ref, fcb_ref,
                 out_ref, seq_ref, gx_ref):
    """Whole 10-layer LSTM + Linear head in one kernel invocation.

    x_ref   : [T*B, H]  f32   time-major, feature-padded, flattened input
    wih_ref : [L, H, 4H] bf16 input->gates weights (transposed, gate order i,f,o,g)
    whh_ref : [L, H, 4H] bf16 hidden->gates weights (transposed, gate order i,f,o,g)
    b_ref   : [L, 1, 4H] f32  combined bias (b_ih + b_hh), gate order i,f,o,g
    fcw_ref : [H, F]     f32  final Linear weight (transposed)
    fcb_ref : [1, F]     f32  final Linear bias
    out_ref : [B, F]     f32  final output
    seq_ref : [T*B, H]   f32  VMEM scratch: current layer's input / output sequence
    gx_ref  : [T*B, 4H]  f32  VMEM scratch: hoisted x-side gate pre-activations
    """
    TB, H = seq_ref.shape
    B = out_ref.shape[0]
    T = TB // B
    L = wih_ref.shape[0]
    H2, H3 = 2 * H, 3 * H

    # Load the (padded) input sequence into the resident scratch.
    seq_ref[...] = x_ref[...]

    def layer_body(l, carry):
        wih = wih_ref[l]            # [H, 4H] bf16
        whh = whh_ref[l]            # [H, 4H] bf16
        bias = b_ref[l]             # [1, 4H] f32

        # Hoisted input-side gate matmul for the whole sequence (+ bias, added once).
        gx_ref[...] = jnp.dot(seq_ref[...].astype(jnp.bfloat16), wih,
                              preferred_element_type=jnp.float32) + bias

        h = jnp.zeros((B, H), jnp.float32)
        c = jnp.zeros((B, H), jnp.float32)
        for t in range(T):          # static, fully unrolled time loop
            gates = gx_ref[pl.ds(t * B, B), :] + jnp.dot(
                h.astype(jnp.bfloat16), whh, preferred_element_type=jnp.float32)
            sig = jax.nn.sigmoid(gates[:, :H3])        # i, f, o in one dispatch
            g = jnp.tanh(gates[:, H3:])
            i_g = sig[:, :H]
            f_g = sig[:, H:H2]
            o_g = sig[:, H2:H3]
            c = f_g * c + i_g * g
            h = o_g * jnp.tanh(c)
            seq_ref[pl.ds(t * B, B), :] = h            # next layer's input at time t
        return carry

    jax.lax.fori_loop(0, L, layer_body, 0)

    # Final timestep of the last layer -> Linear head.
    h_last = seq_ref[pl.ds((T - 1) * B, B), :]
    out_ref[...] = jnp.dot(h_last, fcw_ref[...],
                           preferred_element_type=jnp.float32) + fcb_ref[0]


def series_test_forward(x, w_ih, w_hh, b_ih, b_hh, fc_w, fc_b):
    """x: [B, T, FEAT] float32 (PyTorch batch_first layout).

    w_ih[l]: [4H, in_l] (in_0 = FEAT, in_l>0 = H)   -- PyTorch weight_ih_l{l}
    w_hh[l]: [4H, H]                                -- PyTorch weight_hh_l{l}
    b_ih[l], b_hh[l]: [4H]
    fc_w: [FEAT, H], fc_b: [FEAT]
    """
    B, T, F = x.shape
    H = HIDDEN
    L = NUM_LAYERS
    H2, H3 = 2 * H, 3 * H

    def perm(a):
        # Permute gate blocks along the last axis: torch order (i,f,g,o) -> (i,f,o,g).
        return np.concatenate([a[..., :H2], a[..., H3:], a[..., H2:H3]], axis=-1)

    # --- glue: pad / transpose / gate-permute parameters so every layer is [H, 4H] ---
    wih_stack = np.zeros((L, H, 4 * H), np.float32)
    whh_stack = np.zeros((L, H, 4 * H), np.float32)
    bias_stack = np.zeros((L, 1, 4 * H), np.float32)
    for l in range(L):
        w = np.asarray(w_ih[l], np.float32).T          # [in_l, 4H]
        wih_stack[l, :w.shape[0], :] = perm(w)         # zero-pad layer-0 input rows
        whh_stack[l] = perm(np.asarray(w_hh[l], np.float32).T)
        bias_stack[l, 0] = perm(np.asarray(b_ih[l], np.float32)
                                + np.asarray(b_hh[l], np.float32))

    # time-major, feature-padded, flattened input: [T*B, H]
    x_pad = np.zeros((T, B, H), np.float32)
    x_pad[:, :, :F] = np.transpose(np.asarray(x, np.float32), (1, 0, 2))
    x_pad = x_pad.reshape(T * B, H)

    fcw_t = np.asarray(fc_w, np.float32).T             # [H, FEAT]
    fcb = np.asarray(fc_b, np.float32).reshape(1, F)   # [1, FEAT]

    vmem = pltpu.MemorySpace.VMEM
    return pl.pallas_call(
        _lstm_kernel,
        out_shape=jax.ShapeDtypeStruct((B, F), jnp.float32),
        in_specs=[pl.BlockSpec(memory_space=vmem)] * 6,
        out_specs=pl.BlockSpec(memory_space=vmem),
        scratch_shapes=[pltpu.VMEM((T * B, H), jnp.float32),
                        pltpu.VMEM((T * B, 4 * H), jnp.float32)],
    )(jnp.asarray(x_pad),
      jnp.asarray(wih_stack, dtype=jnp.bfloat16),
      jnp.asarray(whh_stack, dtype=jnp.bfloat16),
      jnp.asarray(bias_stack),
      jnp.asarray(fcw_t),
      jnp.asarray(fcb))


def _numpy_reference(x, w_ih, w_hh, b_ih, b_hh, fc_w, fc_b):
    """Pure NumPy reference matching torch.nn.LSTM (gate order i,f,g,o) + Linear."""
    def sig(v):
        return 1.0 / (1.0 + np.exp(-v))
    x = np.asarray(x, np.float64)
    B, T, _ = x.shape
    H = HIDDEN
    seq = x
    for l in range(NUM_LAYERS):
        wi = np.asarray(w_ih[l], np.float64)
        wh = np.asarray(w_hh[l], np.float64)
        b = np.asarray(b_ih[l], np.float64) + np.asarray(b_hh[l], np.float64)
        h = np.zeros((B, H)); c = np.zeros((B, H))
        outs = []
        for t in range(T):
            g = seq[:, t, :] @ wi.T + h @ wh.T + b
            i_g = sig(g[:, :H]); f_g = sig(g[:, H:2 * H])
            g_g = np.tanh(g[:, 2 * H:3 * H]); o_g = sig(g[:, 3 * H:])
            c = f_g * c + i_g * g_g
            h = o_g * np.tanh(c)
            outs.append(h)
        seq = np.stack(outs, axis=1)
    return seq[:, -1, :] @ np.asarray(fc_w, np.float64).T + np.asarray(fc_b, np.float64)


if __name__ == "__main__":
    B, T = 2, 8   # batch=2, sequence length=8
    H, F, L = HIDDEN, FEAT, NUM_LAYERS

    key = jax.random.PRNGKey(0)
    keys = iter(jax.random.split(key, 4 * L + 4))
    k = 1.0 / np.sqrt(H)   # PyTorch LSTM/Linear init scale

    w_ih, w_hh, b_ih, b_hh = [], [], [], []
    for l in range(L):
        in_l = F if l == 0 else H
        w_ih.append(jax.random.uniform(next(keys), (4 * H, in_l), jnp.float32, -k, k))
        w_hh.append(jax.random.uniform(next(keys), (4 * H, H), jnp.float32, -k, k))
        b_ih.append(jax.random.uniform(next(keys), (4 * H,), jnp.float32, -k, k))
        b_hh.append(jax.random.uniform(next(keys), (4 * H,), jnp.float32, -k, k))
    fc_w = jax.random.uniform(next(keys), (F, H), jnp.float32, -k, k)
    fc_b = jax.random.uniform(next(keys), (F,), jnp.float32, -k, k)
    x = jax.random.normal(next(keys), (B, T, F), jnp.float32)

    out = series_test_forward(x, w_ih, w_hh, b_ih, b_hh, fc_w, fc_b)
    out = jax.block_until_ready(out)

    ref = _numpy_reference(x, w_ih, w_hh, b_ih, b_hh, fc_w, fc_b)
    # bf16 matmul inputs through a 10-layer recurrence -> slightly looser tolerance.
    np.testing.assert_allclose(np.asarray(out), ref, rtol=5e-3, atol=5e-3)

    print("KERNEL_OK")
</pallas_src>

<mosaic_0001>
module attributes {stable_mosaic.version = 11 : i64} {
  func.func @_lstm_kernel(%arg0: memref<16x128xf32, #tpu.memory_space<vmem>>, %arg1: memref<10x128x512xbf16, #tpu.memory_space<vmem>>, %arg2: memref<10x128x512xbf16, #tpu.memory_space<vmem>>, %arg3: memref<10x1x512xf32, #tpu.memory_space<vmem>>, %arg4: memref<128x4xf32, #tpu.memory_space<vmem>>, %arg5: memref<1x4xf32, #tpu.memory_space<vmem>>, %arg6: memref<2x4xf32, #tpu.memory_space<vmem>>, %arg7: memref<16x128xf32, #tpu.memory_space<vmem>>, %arg8: memref<16x512xf32, #tpu.memory_space<vmem>>) attributes {dimension_semantics = [], scalar_prefetch = 0 : i64, scratch_operands = 2 : i64, tpu.core_type = #tpu.core_type<tc>} {
    %c0 = arith.constant 0 : index
    %c0_0 = arith.constant 0 : index
    %0 = vector.load %arg0[%c0, %c0_0] : memref<16x128xf32, #tpu.memory_space<vmem>>, vector<16x128xf32>
    %c0_1 = arith.constant 0 : index
    %c0_2 = arith.constant 0 : index
    %1 = vector.load %arg7[%c0_1, %c0_2] : memref<16x128xf32, #tpu.memory_space<vmem>>, vector<16x128xf32>
    tpu.vector_store %arg7[%c0_1, %c0_2], %0 {strides = array<i32>} : memref<16x128xf32, #tpu.memory_space<vmem>>, vector<16x128xf32>,
    %c0_i32 = arith.constant 0 : i32
    %c10_i32 = arith.constant 10 : i32
    %2 = arith.addi %c0_i32, %c10_i32 : i32
    %c1_i32 = arith.constant 1 : i32
    scf.for %arg9 = %c0_i32 to %2 step %c1_i32  : i32 {
      %12 = arith.index_cast %arg9 : i32 to index
      %c0_11 = arith.constant 0 : index
      %c0_12 = arith.constant 0 : index
      %13 = vector.load %arg1[%12, %c0_11, %c0_12] : memref<10x128x512xbf16, #tpu.memory_space<vmem>>, vector<1x128x512xbf16>
      %14 = vector.shape_cast %13 : vector<1x128x512xbf16> to vector<128x512xbf16>
      %15 = arith.index_cast %arg9 : i32 to index
      %c0_13 = arith.constant 0 : index
      %c0_14 = arith.constant 0 : index
      %16 = vector.load %arg2[%15, %c0_13, %c0_14] : memref<10x128x512xbf16, #tpu.memory_space<vmem>>, vector<1x128x512xbf16>
      %17 = vector.shape_cast %16 : vector<1x128x512xbf16> to vector<128x512xbf16>
      %18 = arith.index_cast %arg9 : i32 to index
      %c0_15 = arith.constant 0 : index
      %c0_16 = arith.constant 0 : index
      %19 = vector.load %arg3[%18, %c0_15, %c0_16] : memref<10x1x512xf32, #tpu.memory_space<vmem>>, vector<1x1x512xf32>
      %20 = vector.shape_cast %19 : vector<1x1x512xf32> to vector<1x512xf32>
      %c0_17 = arith.constant 0 : index
      %c0_18 = arith.constant 0 : index
      %21 = vector.load %arg7[%c0_17, %c0_18] : memref<16x128xf32, #tpu.memory_space<vmem>>, vector<16x128xf32>
      %22 = arith.truncf %21 : vector<16x128xf32> to vector<16x128xbf16>
      %cst_19 = arith.constant dense<0.000000e+00> : vector<16x512xf32>
      %23 = tpu.matmul %22, %14, %cst_19 {dimension_numbers = #tpu.dot_dimension_numbers<[1], [0], [0], [1], [0, 0, 1, 1], [], []>} : vector<16x128xbf16>, vector<128x512xbf16>, vector<16x512xf32> -> vector<16x512xf32>
      %24 = vector.broadcast %20 : vector<1x512xf32> to vector<16x512xf32>
      %25 = arith.addf %23, %24 : vector<16x512xf32>
      %c0_20 = arith.constant 0 : index
      %c0_21 = arith.constant 0 : index
      %26 = vector.load %arg8[%c0_20, %c0_21] : memref<16x512xf32, #tpu.memory_space<vmem>>, vector<16x512xf32>
      tpu.vector_store %arg8[%c0_20, %c0_21], %25 {strides = array<i32>} : memref<16x512xf32, #tpu.memory_space<vmem>>, vector<16x512xf32>,
      %cst_22 = arith.constant 0.000000e+00 : f32
      %27 = vector.broadcast %cst_22 : f32 to vector<2x128xf32>
      %cst_23 = arith.constant 0.000000e+00 : f32
      %28 = vector.broadcast %cst_23 : f32 to vector<2x128xf32>
      %c0_24 = arith.constant 0 : index
      %c0_25 = arith.constant 0 : index
      %29 = vector.load %arg8[%c0_24, %c0_25] : memref<16x512xf32, #tpu.memory_space<vmem>>, vector<2x512xf32>
      %30 = arith.truncf %27 : vector<2x128xf32> to vector<2x128xbf16>
      %cst_26 = arith.constant dense<0.000000e+00> : vector<2x512xf32>
      %31 = tpu.matmul %30, %17, %cst_26 {dimension_numbers = #tpu.dot_dimension_numbers<[1], [0], [0], [1], [0, 0, 1, 1], [], []>} : vector<2x128xbf16>, vector<128x512xbf16>, vector<2x512xf32> -> vector<2x512xf32>
      %32 = arith.addf %29, %31 : vector<2x512xf32>
      %33 = vector.extract_strided_slice %32 {offsets = [0, 0], sizes = [2, 384], strides = [1, 1]} : vector<2x512xf32> to vector<2x384xf32>
      %34 = arith.negf %33 : vector<2x384xf32>
      %35 = math.exp %34 : vector<2x384xf32>
      %cst_27 = arith.constant 1.000000e+00 : f32
      %36 = vector.broadcast %cst_27 : f32 to vector<2x384xf32>
      %37 = arith.addf %36, %35 : vector<2x384xf32>
      %38 = arith.divf %36, %37 : vector<2x384xf32>
      %39 = vector.extract_strided_slice %32 {offsets = [0, 384], sizes = [2, 128], strides = [1, 1]} : vector<2x512xf32> to vector<2x128xf32>
      %40 = math.tanh %39 : vector<2x128xf32>
      %41 = vector.extract_strided_slice %38 {offsets = [0, 0], sizes = [2, 128], strides = [1, 1]} : vector<2x384xf32> to vector<2x128xf32>
      %42 = vector.extract_strided_slice %38 {offsets = [0, 128], sizes = [2, 128], strides = [1, 1]} : vector<2x384xf32> to vector<2x128xf32>
      %43 = vector.extract_strided_slice %38 {offsets = [0, 256], sizes = [2, 128], strides = [1, 1]} : vector<2x384xf32> to vector<2x128xf32>
      %44 = arith.mulf %42, %28 : vector<2x128xf32>
      %45 = arith.mulf %41, %40 : vector<2x128xf32>
      %46 = arith.addf %44, %45 : vector<2x128xf32>
      %47 = math.tanh %46 : vector<2x128xf32>
      %48 = arith.mulf %43, %47 : vector<2x128xf32>
      %c0_28 = arith.constant 0 : index
      %c0_29 = arith.constant 0 : index
      %49 = vector.load %arg7[%c0_28, %c0_29] : memref<16x128xf32, #tpu.memory_space<vmem>>, vector<2x128xf32>
      tpu.vector_store %arg7[%c0_28, %c0_29], %48 {strides = array<i32>} : memref<16x128xf32, #tpu.memory_space<vmem>>, vector<2x128xf32>,
      %c2 = arith.constant 2 : index
      %c0_30 = arith.constant 0 : index
      %50 = vector.load %arg8[%c2, %c0_30] : memref<16x512xf32, #tpu.memory_space<vmem>>, vector<2x512xf32>
      %51 = arith.truncf %48 : vector<2x128xf32> to vector<2x128xbf16>
      %cst_31 = arith.constant dense<0.000000e+00> : vector<2x512xf32>
      %52 = tpu.matmul %51, %17, %cst_31 {dimension_numbers = #tpu.dot_dimension_numbers<[1], [0], [0], [1], [0, 0, 1, 1], [], []>} : vector<2x128xbf16>, vector<128x512xbf16>, vector<2x512xf32> -> vector<2x512xf32>
      %53 = arith.addf %50, %52 : vector<2x512xf32>
      %54 = vector.extract_strided_slice %53 {offsets = [0, 0], sizes = [2, 384], strides = [1, 1]} : vector<2x512xf32> to vector<2x384xf32>
      %55 = arith.negf %54 : vector<2x384xf32>
      %56 = math.exp %55 : vector<2x384xf32>
      %cst_32 = arith.constant 1.000000e+00 : f32
      %57 = vector.broadcast %cst_32 : f32 to vector<2x384xf32>
      %58 = arith.addf %57, %56 : vector<2x384xf32>
      %59 = arith.divf %57, %58 : vector<2x384xf32>
      %60 = vector.extract_strided_slice %53 {offsets = [0, 384], sizes = [2, 128], strides = [1, 1]} : vector<2x512xf32> to vector<2x128xf32>
      %61 = math.tanh %60 : vector<2x128xf32>
      %62 = vector.extract_strided_slice %59 {offsets = [0, 0], sizes = [2, 128], strides = [1, 1]} : vector<2x384xf32> to vector<2x128xf32>
      %63 = vector.extract_strided_slice %59 {offsets = [0, 128], sizes = [2, 128], strides = [1, 1]} : vector<2x384xf32> to vector<2x128xf32>
      %64 = vector.extract_strided_slice %59 {offsets = [0, 256], sizes = [2, 128], strides = [1, 1]} : vector<2x384xf32> to vector<2x128xf32>
      %65 = arith.mulf %63, %46 : vector<2x128xf32>
      %66 = arith.mulf %62, %61 : vector<2x128xf32>
      %67 = arith.addf %65, %66 : vector<2x128xf32>
      %68 = math.tanh %67 : vector<2x128xf32>
      %69 = arith.mulf %64, %68 : vector<2x128xf32>
      %c2_33 = arith.constant 2 : index
      %c0_34 = arith.constant 0 : index
      %70 = vector.load %arg7[%c2_33, %c0_34] : memref<16x128xf32, #tpu.memory_space<vmem>>, vector<2x128xf32>
      tpu.vector_store %arg7[%c2_33, %c0_34], %69 {strides = array<i32>} : memref<16x128xf32, #tpu.memory_space<vmem>>, vector<2x128xf32>,
      %c4 = arith.constant 4 : index
      %c0_35 = arith.constant 0 : index
      %71 = vector.load %arg8[%c4, %c0_35] : memref<16x512xf32, #tpu.memory_space<vmem>>, vector<2x512xf32>
      %72 = arith.truncf %69 : vector<2x128xf32> to vector<2x128xbf16>
      %cst_36 = arith.constant dense<0.000000e+00> : vector<2x512xf32>
      %73 = tpu.matmul %72, %17, %cst_36 {dimension_numbers = #tpu.dot_dimension_numbers<[1], [0], [0], [1], [0, 0, 1, 1], [], []>} : vector<2x128xbf16>, vector<128x512xbf16>, vector<2x512xf32> -> vector<2x512xf32>
      %74 = arith.addf %71, %73 : vector<2x512xf32>
      %75 = vector.extract_strided_slice %74 {offsets = [0, 0], sizes = [2, 384], strides = [1, 1]} : vector<2x512xf32> to vector<2x384xf32>
      %76 = arith.negf %75 : vector<2x384xf32>
      %77 = math.exp %76 : vector<2x384xf32>
      %cst_37 = arith.constant 1.000000e+00 : f32
      %78 = vector.broadcast %cst_37 : f32 to vector<2x384xf32>
      %79 = arith.addf %78, %77 : vector<2x384xf32>
      %80 = arith.divf %78, %79 : vector<2x384xf32>
      %81 = vector.extract_strided_slice %74 {offsets = [0, 384], sizes = [2, 128], strides = [1, 1]} : vector<2x512xf32> to vector<2x128xf32>
      %82 = math.tanh %81 : vector<2x128xf32>
      %83 = vector.extract_strided_slice %80 {offsets = [0, 0], sizes = [2, 128], strides = [1, 1]} : vector<2x384xf32> to vector<2x128xf32>
      %84 = vector.extract_strided_slice %80 {offsets = [0, 128], sizes = [2, 128], strides = [1, 1]} : vector<2x384xf32> to vector<2x128xf32>
      %85 = vector.extract_strided_slice %80 {offsets = [0, 256], sizes = [2, 128], strides = [1, 1]} : vector<2x384xf32> to vector<2x128xf32>
      %86 = arith.mulf %84, %67 : vector<2x128xf32>
      %87 = arith.mulf %83, %82 : vector<2x128xf32>
      %88 = arith.addf %86, %87 : vector<2x128xf32>
      %89 = math.tanh %88 : vector<2x128xf32>
      %90 = arith.mulf %85, %89 : vector<2x128xf32>
      %c4_38 = arith.constant 4 : index
      %c0_39 = arith.constant 0 : index
      %91 = vector.load %arg7[%c4_38, %c0_39] : memref<16x128xf32, #tpu.memory_space<vmem>>, vector<2x128xf32>
      tpu.vector_store %arg7[%c4_38, %c0_39], %90 {strides = array<i32>} : memref<16x128xf32, #tpu.memory_space<vmem>>, vector<2x128xf32>,
      %c6 = arith.constant 6 : index
      %c0_40 = arith.constant 0 : index
      %92 = vector.load %arg8[%c6, %c0_40] : memref<16x512xf32, #tpu.memory_space<vmem>>, vector<2x512xf32>
      %93 = arith.truncf %90 : vector<2x128xf32> to vector<2x128xbf16>
      %cst_41 = arith.constant dense<0.000000e+00> : vector<2x512xf32>
      %94 = tpu.matmul %93, %17, %cst_41 {dimension_numbers = #tpu.dot_dimension_numbers<[1], [0], [0], [1], [0, 0, 1, 1], [], []>} : vector<2x128xbf16>, vector<128x512xbf16>, vector<2x512xf32> -> vector<2x512xf32>
      %95 = arith.addf %92, %94 : vector<2x512xf32>
      %96 = vector.extract_strided_slice %95 {offsets = [0, 0], sizes = [2, 384], strides = [1, 1]} : vector<2x512xf32> to vector<2x384xf32>
      %97 = arith.negf %96 : vector<2x384xf32>
      %98 = math.exp %97 : vector<2x384xf32>
      %cst_42 = arith.constant 1.000000e+00 : f32
      %99 = vector.broadcast %cst_42 : f32 to vector<2x384xf32>
      %100 = arith.addf %99, %98 : vector<2x384xf32>
      %101 = arith.divf %99, %100 : vector<2x384xf32>
      %102 = vector.extract_strided_slice %95 {offsets = [0, 384], sizes = [2, 128], strides = [1, 1]} : vector<2x512xf32> to vector<2x128xf32>
      %103 = math.tanh %102 : vector<2x128xf32>
      %104 = vector.extract_strided_slice %101 {offsets = [0, 0], sizes = [2, 128], strides = [1, 1]} : vector<2x384xf32> to vector<2x128xf32>
      %105 = vector.extract_strided_slice %101 {offsets = [0, 128], sizes = [2, 128], strides = [1, 1]} : vector<2x384xf32> to vector<2x128xf32>
      %106 = vector.extract_strided_slice %101 {offsets = [0, 256], sizes = [2, 128], strides = [1, 1]} : vector<2x384xf32> to vector<2x128xf32>
      %107 = arith.mulf %105, %88 : vector<2x128xf32>
      %108 = arith.mulf %104, %103 : vector<2x128xf32>
      %109 = arith.addf %107, %108 : vector<2x128xf32>
      %110 = math.tanh %109 : vector<2x128xf32>
      %111 = arith.mulf %106, %110 : vector<2x128xf32>
      %c6_43 = arith.constant 6 : index
      %c0_44 = arith.constant 0 : index
      %112 = vector.load %arg7[%c6_43, %c0_44] : memref<16x128xf32, #tpu.memory_space<vmem>>, vector<2x128xf32>
      tpu.vector_store %arg7[%c6_43, %c0_44], %111 {strides = array<i32>} : memref<16x128xf32, #tpu.memory_space<vmem>>, vector<2x128xf32>,
      %c8 = arith.constant 8 : index
      %c0_45 = arith.constant 0 : index
      %113 = vector.load %arg8[%c8, %c0_45] : memref<16x512xf32, #tpu.memory_space<vmem>>, vector<2x512xf32>
      %114 = arith.truncf %111 : vector<2x128xf32> to vector<2x128xbf16>
      %cst_46 = arith.constant dense<0.000000e+00> : vector<2x512xf32>
      %115 = tpu.matmul %114, %17, %cst_46 {dimension_numbers = #tpu.dot_dimension_numbers<[1], [0], [0], [1], [0, 0, 1, 1], [], []>} : vector<2x128xbf16>, vector<128x512xbf16>, vector<2x512xf32> -> vector<2x512xf32>
      %116 = arith.addf %113, %115 : vector<2x512xf32>
      %117 = vector.extract_strided_slice %116 {offsets = [0, 0], sizes = [2, 384], strides = [1, 1]} : vector<2x512xf32> to vector<2x384xf32>
      %118 = arith.negf %117 : vector<2x384xf32>
      %119 = math.exp %118 : vector<2x384xf32>
      %cst_47 = arith.constant 1.000000e+00 : f32
      %120 = vector.broadcast %cst_47 : f32 to vector<2x384xf32>
      %121 = arith.addf %120, %119 : vector<2x384xf32>
      %122 = arith.divf %120, %121 : vector<2x384xf32>
      %123 = vector.extract_strided_slice %116 {offsets = [0, 384], sizes = [2, 128], strides = [1, 1]} : vector<2x512xf32> to vector<2x128xf32>
      %124 = math.tanh %123 : vector<2x128xf32>
      %125 = vector.extract_strided_slice %122 {offsets = [0, 0], sizes = [2, 128], strides = [1, 1]} : vector<2x384xf32> to vector<2x128xf32>
      %126 = vector.extract_strided_slice %122 {offsets = [0, 128], sizes = [2, 128], strides = [1, 1]} : vector<2x384xf32> to vector<2x128xf32>
      %127 = vector.extract_strided_slice %122 {offsets = [0, 256], sizes = [2, 128], strides = [1, 1]} : vector<2x384xf32> to vector<2x128xf32>
      %128 = arith.mulf %126, %109 : vector<2x128xf32>
      %129 = arith.mulf %125, %124 : vector<2x128xf32>
      %130 = arith.addf %128, %129 : vector<2x128xf32>
      %131 = math.tanh %130 : vector<2x128xf32>
      %132 = arith.mulf %127, %131 : vector<2x128xf32>
      %c8_48 = arith.constant 8 : index
      %c0_49 = arith.constant 0 : index
      %133 = vector.load %arg7[%c8_48, %c0_49] : memref<16x128xf32, #tpu.memory_space<vmem>>, vector<2x128xf32>
      tpu.vector_store %arg7[%c8_48, %c0_49], %132 {strides = array<i32>} : memref<16x128xf32, #tpu.memory_space<vmem>>, vector<2x128xf32>,
      %c10 = arith.constant 10 : index
      %c0_50 = arith.constant 0 : index
      %134 = vector.load %arg8[%c10, %c0_50] : memref<16x512xf32, #tpu.memory_space<vmem>>, vector<2x512xf32>
      %135 = arith.truncf %132 : vector<2x128xf32> to vector<2x128xbf16>
      %cst_51 = arith.constant dense<0.000000e+00> : vector<2x512xf32>
      %136 = tpu.matmul %135, %17, %cst_51 {dimension_numbers = #tpu.dot_dimension_numbers<[1], [0], [0], [1], [0, 0, 1, 1], [], []>} : vector<2x128xbf16>, vector<128x512xbf16>, vector<2x512xf32> -> vector<2x512xf32>
      %137 = arith.addf %134, %136 : vector<2x512xf32>
      %138 = vector.extract_strided_slice %137 {offsets = [0, 0], sizes = [2, 384], strides = [1, 1]} : vector<2x512xf32> to vector<2x384xf32>
      %139 = arith.negf %138 : vector<2x384xf32>
      %140 = math.exp %139 : vector<2x384xf32>
      %cst_52 = arith.constant 1.000000e+00 : f32
      %141 = vector.broadcast %cst_52 : f32 to vector<2x384xf32>
      %142 = arith.addf %141, %140 : vector<2x384xf32>
      %143 = arith.divf %141, %142 : vector<2x384xf32>
      %144 = vector.extract_strided_slice %137 {offsets = [0, 384], sizes = [2, 128], strides = [1, 1]} : vector<2x512xf32> to vector<2x128xf32>
      %145 = math.tanh %144 : vector<2x128xf32>
      %146 = vector.extract_strided_slice %143 {offsets = [0, 0], sizes = [2, 128], strides = [1, 1]} : vector<2x384xf32> to vector<2x128xf32>
      %147 = vector.extract_strided_slice %143 {offsets = [0, 128], sizes = [2, 128], strides = [1, 1]} : vector<2x384xf32> to vector<2x128xf32>
      %148 = vector.extract_strided_slice %143 {offsets = [0, 256], sizes = [2, 128], strides = [1, 1]} : vector<2x384xf32> to vector<2x128xf32>
      %149 = arith.mulf %147, %130 : vector<2x128xf32>
      %150 = arith.mulf %146, %145 : vector<2x128xf32>
      %151 = arith.addf %149, %150 : vector<2x128xf32>
      %152 = math.tanh %151 : vector<2x128xf32>
      %153 = arith.mulf %148, %152 : vector<2x128xf32>
      %c10_53 = arith.constant 10 : index
      %c0_54 = arith.constant 0 : index
      %154 = vector.load %arg7[%c10_53, %c0_54] : memref<16x128xf32, #tpu.memory_space<vmem>>, vector<2x128xf32>
      tpu.vector_store %arg7[%c10_53, %c0_54], %153 {strides = array<i32>} : memref<16x128xf32, #tpu.memory_space<vmem>>, vector<2x128xf32>,
      %c12 = arith.constant 12 : index
      %c0_55 = arith.constant 0 : index
      %155 = vector.load %arg8[%c12, %c0_55] : memref<16x512xf32, #tpu.memory_space<vmem>>, vector<2x512xf32>
      %156 = arith.truncf %153 : vector<2x128xf32> to vector<2x128xbf16>
      %cst_56 = arith.constant dense<0.000000e+00> : vector<2x512xf32>
      %157 = tpu.matmul %156, %17, %cst_56 {dimension_numbers = #tpu.dot_dimension_numbers<[1], [0], [0], [1], [0, 0, 1, 1], [], []>} : vector<2x128xbf16>, vector<128x512xbf16>, vector<2x512xf32> -> vector<2x512xf32>
      %158 = arith.addf %155, %157 : vector<2x512xf32>
      %159 = vector.extract_strided_slice %158 {offsets = [0, 0], sizes = [2, 384], strides = [1, 1]} : vector<2x512xf32> to vector<2x384xf32>
      %160 = arith.negf %159 : vector<2x384xf32>
      %161 = math.exp %160 : vector<2x384xf32>
      %cst_57 = arith.constant 1.000000e+00 : f32
      %162 = vector.broadcast %cst_57 : f32 to vector<2x384xf32>
      %163 = arith.addf %162, %161 : vector<2x384xf32>
      %164 = arith.divf %162, %163 : vector<2x384xf32>
      %165 = vector.extract_strided_slice %158 {offsets = [0, 384], sizes = [2, 128], strides = [1, 1]} : vector<2x512xf32> to vector<2x128xf32>
      %166 = math.tanh %165 : vector<2x128xf32>
      %167 = vector.extract_strided_slice %164 {offsets = [0, 0], sizes = [2, 128], strides = [1, 1]} : vector<2x384xf32> to vector<2x128xf32>
      %168 = vector.extract_strided_slice %164 {offsets = [0, 128], sizes = [2, 128], strides = [1, 1]} : vector<2x384xf32> to vector<2x128xf32>
      %169 = vector.extract_strided_slice %164 {offsets = [0, 256], sizes = [2, 128], strides = [1, 1]} : vector<2x384xf32> to vector<2x128xf32>
      %170 = arith.mulf %168, %151 : vector<2x128xf32>
      %171 = arith.mulf %167, %166 : vector<2x128xf32>
      %172 = arith.addf %170, %171 : vector<2x128xf32>
      %173 = math.tanh %172 : vector<2x128xf32>
      %174 = arith.mulf %169, %173 : vector<2x128xf32>
      %c12_58 = arith.constant 12 : index
      %c0_59 = arith.constant 0 : index
      %175 = vector.load %arg7[%c12_58, %c0_59] : memref<16x128xf32, #tpu.memory_space<vmem>>, vector<2x128xf32>
      tpu.vector_store %arg7[%c12_58, %c0_59], %174 {strides = array<i32>} : memref<16x128xf32, #tpu.memory_space<vmem>>, vector<2x128xf32>,
      %c14_60 = arith.constant 14 : index
      %c0_61 = arith.constant 0 : index
      %176 = vector.load %arg8[%c14_60, %c0_61] : memref<16x512xf32, #tpu.memory_space<vmem>>, vector<2x512xf32>
      %177 = arith.truncf %174 : vector<2x128xf32> to vector<2x128xbf16>
      %cst_62 = arith.constant dense<0.000000e+00> : vector<2x512xf32>
      %178 = tpu.matmul %177, %17, %cst_62 {dimension_numbers = #tpu.dot_dimension_numbers<[1], [0], [0], [1], [0, 0, 1, 1], [], []>} : vector<2x128xbf16>, vector<128x512xbf16>, vector<2x512xf32> -> vector<2x512xf32>
      %179 = arith.addf %176, %178 : vector<2x512xf32>
      %180 = vector.extract_strided_slice %179 {offsets = [0, 0], sizes = [2, 384], strides = [1, 1]} : vector<2x512xf32> to vector<2x384xf32>
      %181 = arith.negf %180 : vector<2x384xf32>
      %182 = math.exp %181 : vector<2x384xf32>
      %cst_63 = arith.constant 1.000000e+00 : f32
      %183 = vector.broadcast %cst_63 : f32 to vector<2x384xf32>
      %184 = arith.addf %183, %182 : vector<2x384xf32>
      %185 = arith.divf %183, %184 : vector<2x384xf32>
      %186 = vector.extract_strided_slice %179 {offsets = [0, 384], sizes = [2, 128], strides = [1, 1]} : vector<2x512xf32> to vector<2x128xf32>
      %187 = math.tanh %186 : vector<2x128xf32>
      %188 = vector.extract_strided_slice %185 {offsets = [0, 0], sizes = [2, 128], strides = [1, 1]} : vector<2x384xf32> to vector<2x128xf32>
      %189 = vector.extract_strided_slice %185 {offsets = [0, 128], sizes = [2, 128], strides = [1, 1]} : vector<2x384xf32> to vector<2x128xf32>
      %190 = vector.extract_strided_slice %185 {offsets = [0, 256], sizes = [2, 128], strides = [1, 1]} : vector<2x384xf32> to vector<2x128xf32>
      %191 = arith.mulf %189, %172 : vector<2x128xf32>
      %192 = arith.mulf %188, %187 : vector<2x128xf32>
      %193 = arith.addf %191, %192 : vector<2x128xf32>
      %194 = math.tanh %193 : vector<2x128xf32>
      %195 = arith.mulf %190, %194 : vector<2x128xf32>
      %c14_64 = arith.constant 14 : index
      %c0_65 = arith.constant 0 : index
      %196 = vector.load %arg7[%c14_64, %c0_65] : memref<16x128xf32, #tpu.memory_space<vmem>>, vector<2x128xf32>
      tpu.vector_store %arg7[%c14_64, %c0_65], %195 {strides = array<i32>} : memref<16x128xf32, #tpu.memory_space<vmem>>, vector<2x128xf32>,
    }
    %c10_i32_3 = arith.constant 10 : i32
    %c14 = arith.constant 14 : index
    %c0_4 = arith.constant 0 : index
    %3 = vector.load %arg7[%c14, %c0_4] : memref<16x128xf32, #tpu.memory_space<vmem>>, vector<2x128xf32>
    %c0_5 = arith.constant 0 : index
    %c0_6 = arith.constant 0 : index
    %4 = vector.load %arg4[%c0_5, %c0_6] : memref<128x4xf32, #tpu.memory_space<vmem>>, vector<128x4xf32>
    %cst = arith.constant dense<0.000000e+00> : vector<2x4xf32>
    %5 = tpu.matmul %3, %4, %cst {dimension_numbers = #tpu.dot_dimension_numbers<[1], [0], [0], [1], [0, 0, 1, 1], [], []>} : vector<2x128xf32>, vector<128x4xf32>, vector<2x4xf32> -> vector<2x4xf32>
    %c0_7 = arith.constant 0 : index
    %c0_8 = arith.constant 0 : index
    %6 = vector.load %arg5[%c0_7, %c0_8] : memref<1x4xf32, #tpu.memory_space<vmem>>, vector<1x4xf32>
    %7 = vector.shape_cast %6 : vector<1x4xf32> to vector<4xf32>
    %8 = vector.shape_cast %7 : vector<4xf32> to vector<1x4xf32>
    %9 = vector.broadcast %8 : vector<1x4xf32> to vector<2x4xf32>
    %10 = arith.addf %5, %9 : vector<2x4xf32>
    %c0_9 = arith.constant 0 : index
    %c0_10 = arith.constant 0 : index
    %11 = vector.load %arg6[%c0_9, %c0_10] : memref<2x4xf32, #tpu.memory_space<vmem>>, vector<2x4xf32>
    tpu.vector_store %arg6[%c0_9, %c0_10], %10 {strides = array<i32>} : memref<2x4xf32, #tpu.memory_space<vmem>>, vector<2x4xf32>,
    return
  }
}

</mosaic_0001>

<llo_original>
// kernel: tpu_custom_call.1
$region0: #{tpu_custom_call.1}
  #allocation0 [shape = 'u32[]', space=smem, size = 0x4, offset = 0x4, fixed_abs, tag = 'smem constant byte address 0x4 - core index']
  #allocation1 [shape = 'u32[144,128]{1,0:T(1,128)}', space=vmem, size = 0x12000, scoped, tag = 'internal scratch']
  #allocation2 [shape = 'f32[16,128]{1,0:T(8,128)}', space=vmem, size = 0x2000, scoped, tag = 'scratch operand']
  #allocation3 [shape = 'f32[16,512]{1,0:T(8,128)}', space=vmem, size = 0x8000, scoped, tag = 'scratch operand']
  %s0 = inlined_call_operand.hbm [shape: f32[16,128], index: 0, kind: input, shape index: {}]
  %s1 = inlined_call_operand.hbm [shape: bf16[10,128,512], index: 1, kind: input, shape index: {}]
  %s2 = inlined_call_operand.hbm [shape: bf16[10,128,512], index: 2, kind: input, shape index: {}]
  %s3 = inlined_call_operand.hbm [shape: f32[10,1,512], index: 3, kind: input, shape index: {}]
  %s4 = inlined_call_operand.vmem [shape: f32[128,4], index: 4, kind: input, shape index: {}]
  %s5 = inlined_call_operand.hbm [shape: f32[1,4], index: 5, kind: input, shape index: {}]
  %s6 = inlined_call_operand.hbm [shape: f32[2,4], index: 6, kind: output, shape index: {}]
  %s7 = sld [smem:[#allocation0]]
  $region61: #{tpu_custom_call.1} parent=0
    _
  %s9 = ssub.s32 1, %s7
  %s10 = scalar_select 0, %s9, %s7
  $region1: #{tpu_custom_call.1} parent=0
    #allocation4 [shape = 'u8[8192]{0}', space=vmem, size = 0x2000, scoped, tag = 'input window, operand 0, single buffered']
    #allocation5 [shape = 's32[1]{0}', space=sflag, size = 0x4, scoped, tag = 'scoped memory for tpu_custom_call.1']
    #allocation6 [shape = 's32[1]{0}', space=sflag, size = 0x4, scoped, tag = 'scoped memory for tpu_custom_call.1']
    #allocation7 [shape = 'u8[1310720]{0}', space=vmem, size = 0x140000, scoped, tag = 'input window, operand 1, single buffered']
    #allocation8 [shape = 's32[1]{0}', space=sflag, size = 0x4, scoped, tag = 'scoped memory for tpu_custom_call.1']
    #allocation9 [shape = 'u8[1310720]{0}', space=vmem, size = 0x140000, scoped, tag = 'input window, operand 2, single buffered']
    #allocation10 [shape = 'u8[20480]{0}', space=vmem, size = 0x5000, scoped, tag = 'input window, operand 3, single buffered']
    #allocation11 [shape = 's32[1]{0}', space=sflag, size = 0x4, scoped, tag = 'scoped memory for tpu_custom_call.1']
    #allocation12 [shape = 'u8[512]{0}', space=vmem, size = 0x400, scoped, tag = 'input window, operand 5, single buffered']
    #allocation13 [shape = 'u8[1024]{0}', space=vmem, size = 0x400, scoped, tag = 'output window, operand 0, single buffered']
    %11 = vsyncpa [#allocation5], 0
    %12 = vsyncpa [#allocation8], 0
    %13 = vsyncpa [#allocation11], 0
    %14 = vsyncpa [#allocation6], 0
    // Predicated region
    $region2: #{tpu_custom_call.1} parent=1 // pred_check
      _
    $region3: #{tpu_custom_call.1} parent=1 // pred_check_branch
      %16 = sbr.rel (0) target = $region5
    $region4: #{tpu_custom_call.1} parent=1 // pred_region
      %s18 = ssub.s32 256, 256
      %19 = vsyncadd [#allocation5], %s18
      %s20 = sshll.u32 [#allocation4], 4
      %s21 = int_to_ptr.vmem [resolvable:$true] %s20
      %26 = dma.hbm_to_vmem [thread:$0]  %s0, 256, %s21, [#allocation5], 128, 128, 8
    $region5: #{tpu_custom_call.1} parent=1 // pred_fallthru
      _
    // Predicated region
    $region6: #{tpu_custom_call.1} parent=1 // pred_check
      _
    $region7: #{tpu_custom_call.1} parent=1 // pred_check_branch
      %28 = sbr.rel (0) target = $region9
    $region8: #{tpu_custom_call.1} parent=1 // pred_region
      %s30 = ssub.s32 40960, 40960
      %31 = vsyncadd [#allocation8], %s30
      %s32 = sshll.u32 [#allocation7], 4
      %s33 = int_to_ptr.vmem [resolvable:$true] %s32
      %38 = dma.hbm_to_vmem [thread:$0]  %s1, 40960, %s33, [#allocation8], 256, 256, 16
    $region9: #{tpu_custom_call.1} parent=1 // pred_fallthru
      _
    // Predicated region
    $region10: #{tpu_custom_call.1} parent=1 // pred_check
      _
    $region11: #{tpu_custom_call.1} parent=1 // pred_check_branch
      %40 = sbr.rel (0) target = $region13
    $region12: #{tpu_custom_call.1} parent=1 // pred_region
      %s42 = ssub.s32 40960, 40960
      %43 = vsyncadd [#allocation8], %s42
      %s44 = sshll.u32 [#allocation9], 4
      %s45 = int_to_ptr.vmem [resolvable:$true] %s44
      %50 = dma.hbm_to_vmem [thread:$0]  %s2, 40960, %s45, [#allocation8], 256, 256, 16
    $region13: #{tpu_custom_call.1} parent=1 // pred_fallthru
      _
    // Predicated region
    $region14: #{tpu_custom_call.1} parent=1 // pred_check
      _
    $region15: #{tpu_custom_call.1} parent=1 // pred_check_branch
      %52 = sbr.rel (0) target = $region17
    $region16: #{tpu_custom_call.1} parent=1 // pred_region
      %s54 = ssub.s32 640, 640
      %55 = vsyncadd [#allocation11], %s54
      %s56 = sshll.u32 [#allocation10], 4
      %s57 = int_to_ptr.vmem [resolvable:$true] %s56
      %62 = dma.hbm_to_vmem [thread:$0]  %s3, 640, %s57, [#allocation11], 64, 64, 4
    $region17: #{tpu_custom_call.1} parent=1 // pred_fallthru
      _
    // Predicated region
    $region18: #{tpu_custom_call.1} parent=1 // pred_check
      _
    $region19: #{tpu_custom_call.1} parent=1 // pred_check_branch
      %64 = sbr.rel (0) target = $region21
    $region20: #{tpu_custom_call.1} parent=1 // pred_region
      _
    $region21: #{tpu_custom_call.1} parent=1 // pred_fallthru
      _
    // Predicated region
    $region22: #{tpu_custom_call.1} parent=1 // pred_check
      _
    $region23: #{tpu_custom_call.1} parent=1 // pred_check_branch
      %66 = sbr.rel (0) target = $region25
    $region24: #{tpu_custom_call.1} parent=1 // pred_region
      %s68 = ssub.s32 16, 16
      %69 = vsyncadd [#allocation11], %s68
      %s71 = sshll.u32 [#allocation12], 4
      %s72 = int_to_ptr.vmem [resolvable:$true] %s71
      %74 = dma.hbm_to_vmem [thread:$0]  %s5, 16, %s72, [#allocation11]
    $region25: #{tpu_custom_call.1} parent=1 // pred_fallthru
      _
    // Predicated region
    $region26: #{tpu_custom_call.1} parent=1 // pred_check
      _
    $region27: #{tpu_custom_call.1} parent=1 // pred_check_branch
      %76 = sbr.rel (0) target = $region29
    $region28: #{tpu_custom_call.1} parent=1 // pred_region
      %77 = dma.done [#allocation5], 256
    $region29: #{tpu_custom_call.1} parent=1 // pred_fallthru
      _
    // Predicated region
    $region30: #{tpu_custom_call.1} parent=1 // pred_check
      _
    $region31: #{tpu_custom_call.1} parent=1 // pred_check_branch
      %79 = sbr.rel (0) target = $region33
    $region32: #{tpu_custom_call.1} parent=1 // pred_region
      %80 = dma.done [#allocation8], 40960
    $region33: #{tpu_custom_call.1} parent=1 // pred_fallthru
      _
    // Predicated region
    $region34: #{tpu_custom_call.1} parent=1 // pred_check
      _
    $region35: #{tpu_custom_call.1} parent=1 // pred_check_branch
      %82 = sbr.rel (0) target = $region37
    $region36: #{tpu_custom_call.1} parent=1 // pred_region
      %83 = dma.done [#allocation8], 40960
    $region37: #{tpu_custom_call.1} parent=1 // pred_fallthru
      _
    // Predicated region
    $region38: #{tpu_custom_call.1} parent=1 // pred_check
      _
    $region39: #{tpu_custom_call.1} parent=1 // pred_check_branch
      %85 = sbr.rel (0) target = $region41
    $region40: #{tpu_custom_call.1} parent=1 // pred_region
      %86 = dma.done [#allocation11], 640
    $region41: #{tpu_custom_call.1} parent=1 // pred_fallthru
      _
    // Predicated region
    $region42: #{tpu_custom_call.1} parent=1 // pred_check
      _
    $region43: #{tpu_custom_call.1} parent=1 // pred_check_branch
      %88 = sbr.rel (0) target = $region45
    $region44: #{tpu_custom_call.1} parent=1 // pred_region
      %89 = dma.done [#allocation11], 16
    $region45: #{tpu_custom_call.1} parent=1 // pred_fallthru
      _
    %v91 = vld [vmem:[#allocation4] sm:$0xff]
    %v92 = vld [vmem:[#allocation4 + $0x8] sm:$0xff]
    %93 = vst [vmem:[#allocation2] sm:$0xff] %v91
    %94 = vst [vmem:[#allocation2 + $0x8] sm:$0xff] %v92
    loop: start=0, step=1, limit=10
    $region46: #{tpu_custom_call.1} parent=1 // loop_pre_header
      _
    $region47: #{tpu_custom_call.1} parent=1 // loop_header
      %s96 = sphi 0, %s100
      %p97 = scmp.ge.s32.totalorder %s96, 10
    $region48: #{tpu_custom_call.1} parent=1 // loop_header_branch
      %99 = sbr.rel (%p97) target = $region52
    $region49: #{tpu_custom_call.1} parent=1 // loop_body
      %s101 = smul.u32 %s96, 64
      %s102 = smul.addr %s101, 4
      %s103 = scalar_lea.vmem [#allocation7], %s102
      %v104 = vld [vmem:[%s103] sm:$0xff]
      %v105 = vld [vmem:[%s103 + $0x8] sm:$0xff]
      %v106 = vld [vmem:[%s103 + $0x10] sm:$0xff]
      %v107 = vld [vmem:[%s103 + $0x18] sm:$0xff]
      %v108 = vld [vmem:[%s103 + $0x20] sm:$0xff]
      %v109 = vld [vmem:[%s103 + $0x28] sm:$0xff]
      %v110 = vld [vmem:[%s103 + $0x30] sm:$0xff]
      %v111 = vld [vmem:[%s103 + $0x38] sm:$0xff]
      %v112 = vld [vmem:[%s103 + $0x40] sm:$0xff]
      %v113 = vld [vmem:[%s103 + $0x48] sm:$0xff]
      %v114 = vld [vmem:[%s103 + $0x50] sm:$0xff]
      %v115 = vld [vmem:[%s103 + $0x58] sm:$0xff]
      %v116 = vld [vmem:[%s103 + $0x60] sm:$0xff]
      %v117 = vld [vmem:[%s103 + $0x68] sm:$0xff]
      %v118 = vld [vmem:[%s103 + $0x70] sm:$0xff]
      %v119 = vld [vmem:[%s103 + $0x78] sm:$0xff]
      %v120 = vld [vmem:[%s103 + $0x80] sm:$0xff]
      %v121 = vld [vmem:[%s103 + $0x88] sm:$0xff]
      %v122 = vld [vmem:[%s103 + $0x90] sm:$0xff]
      %v123 = vld [vmem:[%s103 + $0x98] sm:$0xff]
      %v124 = vld [vmem:[%s103 + $0xa0] sm:$0xff]
      %v125 = vld [vmem:[%s103 + $0xa8] sm:$0xff]
      %v126 = vld [vmem:[%s103 + $0xb0] sm:$0xff]
      %v127 = vld [vmem:[%s103 + $0xb8] sm:$0xff]
      %v128 = vld [vmem:[%s103 + $0xc0] sm:$0xff]
      %v129 = vld [vmem:[%s103 + $0xc8] sm:$0xff]
      %v130 = vld [vmem:[%s103 + $0xd0] sm:$0xff]
      %v131 = vld [vmem:[%s103 + $0xd8] sm:$0xff]
      %v132 = vld [vmem:[%s103 + $0xe0] sm:$0xff]
      %v133 = vld [vmem:[%s103 + $0xe8] sm:$0xff]
      %v134 = vld [vmem:[%s103 + $0xf0] sm:$0xff]
      %v135 = vld [vmem:[%s103 + $0xf8] sm:$0xff]
      %s136 = smul.addr %s101, 4
      %s137 = scalar_lea.vmem [#allocation9], %s136
      %v138 = vld [vmem:[%s137] sm:$0xff]
      %v139 = vld [vmem:[%s137 + $0x8] sm:$0xff]
      %v140 = vld [vmem:[%s137 + $0x10] sm:$0xff]
      %v141 = vld [vmem:[%s137 + $0x18] sm:$0xff]
      %v142 = vld [vmem:[%s137 + $0x20] sm:$0xff]
      %v143 = vld [vmem:[%s137 + $0x28] sm:$0xff]
      %v144 = vld [vmem:[%s137 + $0x30] sm:$0xff]
      %v145 = vld [vmem:[%s137 + $0x38] sm:$0xff]
      %v146 = vld [vmem:[%s137 + $0x40] sm:$0xff]
      %v147 = vld [vmem:[%s137 + $0x48] sm:$0xff]
      %v148 = vld [vmem:[%s137 + $0x50] sm:$0xff]
      %v149 = vld [vmem:[%s137 + $0x58] sm:$0xff]
      %v150 = vld [vmem:[%s137 + $0x60] sm:$0xff]
      %v151 = vld [vmem:[%s137 + $0x68] sm:$0xff]
      %v152 = vld [vmem:[%s137 + $0x70] sm:$0xff]
      %v153 = vld [vmem:[%s137 + $0x78] sm:$0xff]
      %v154 = vld [vmem:[%s137 + $0x80] sm:$0xff]
      %v155 = vld [vmem:[%s137 + $0x88] sm:$0xff]
      %v156 = vld [vmem:[%s137 + $0x90] sm:$0xff]
      %v157 = vld [vmem:[%s137 + $0x98] sm:$0xff]
      %v158 = vld [vmem:[%s137 + $0xa0] sm:$0xff]
      %v159 = vld [vmem:[%s137 + $0xa8] sm:$0xff]
      %v160 = vld [vmem:[%s137 + $0xb0] sm:$0xff]
      %v161 = vld [vmem:[%s137 + $0xb8] sm:$0xff]
      %v162 = vld [vmem:[%s137 + $0xc0] sm:$0xff]
      %v163 = vld [vmem:[%s137 + $0xc8] sm:$0xff]
      %v164 = vld [vmem:[%s137 + $0xd0] sm:$0xff]
      %v165 = vld [vmem:[%s137 + $0xd8] sm:$0xff]
      %v166 = vld [vmem:[%s137 + $0xe0] sm:$0xff]
      %v167 = vld [vmem:[%s137 + $0xe8] sm:$0xff]
      %v168 = vld [vmem:[%s137 + $0xf0] sm:$0xff]
      %v169 = vld [vmem:[%s137 + $0xf8] sm:$0xff]
      %s170 = smul.u32 %s96, 4
      %s171 = scalar_lea.vmem [#allocation10], %s170
      %v172 = vld [vmem:[%s171] sm:$0xf]
      %v173 = vld [vmem:[#allocation2] sm:$0xff]
      %v174 = vld [vmem:[#allocation2 + $0x8] sm:$0xff]
      %v175 = vpack.c.bf16 %v174, %v173
      %v177 = vlaneseq
      %v178 = vshrl.u32 %v177, 7
      %v179 = vsub.s32 0, %v178
      %v180 = vrot.slane %v172, %v179
      %v181 = vlaneseq
      %v182 = vshrl.u32 %v181, 7
      %v183 = vsub.s32 1, %v182
      %v184 = vrot.slane %v172, %v183
      %v185 = vlaneseq
      %v186 = vshrl.u32 %v185, 7
      %v187 = vsub.s32 2, %v186
      %v188 = vrot.slane %v172, %v187
      %v189 = vlaneseq
      %v190 = vshrl.u32 %v189, 7
      %v191 = vsub.s32 3, %v190
      %v192 = vrot.slane %v172, %v191
      %v229 = vunpack.c.l.b16 %v104
      %v230 = vunpack.c.h.b16 %v104
      %v231 = vunpack.c.l.b16 %v105
      %v232 = vunpack.c.h.b16 %v105
      %v233 = vunpack.c.l.b16 %v106
      %v234 = vunpack.c.h.b16 %v106
      %v235 = vunpack.c.l.b16 %v107
      %v236 = vunpack.c.h.b16 %v107
      %v237 = vunpack.c.l.b16 %v108
      %v238 = vunpack.c.h.b16 %v108
      %v239 = vunpack.c.l.b16 %v109
      %v240 = vunpack.c.h.b16 %v109
      %v241 = vunpack.c.l.b16 %v110
      %v242 = vunpack.c.h.b16 %v110
      %v243 = vunpack.c.l.b16 %v111
      %v244 = vunpack.c.h.b16 %v111
      %v245 = vunpack.c.l.b16 %v112
      %v246 = vunpack.c.h.b16 %v112
      %v247 = vunpack.c.l.b16 %v113
      %v248 = vunpack.c.h.b16 %v113
      %v249 = vunpack.c.l.b16 %v114
      %v250 = vunpack.c.h.b16 %v114
      %v251 = vunpack.c.l.b16 %v115
      %v252 = vunpack.c.h.b16 %v115
      %v253 = vunpack.c.l.b16 %v116
      %v254 = vunpack.c.h.b16 %v116
      %v255 = vunpack.c.l.b16 %v117
      %v256 = vunpack.c.h.b16 %v117
      %v257 = vunpack.c.l.b16 %v118
      %v258 = vunpack.c.h.b16 %v118
      %v259 = vunpack.c.l.b16 %v119
      %v260 = vunpack.c.h.b16 %v119
      %v261 = vunpack.c.l.b16 %v120
      %v262 = vunpack.c.h.b16 %v120
      %v263 = vunpack.c.l.b16 %v121
      %v264 = vunpack.c.h.b16 %v121
      %v265 = vunpack.c.l.b16 %v122
      %v266 = vunpack.c.h.b16 %v122
      %v267 = vunpack.c.l.b16 %v123
      %v268 = vunpack.c.h.b16 %v123
      %v269 = vunpack.c.l.b16 %v124
      %v270 = vunpack.c.h.b16 %v124
      %v271 = vunpack.c.l.b16 %v125
      %v272 = vunpack.c.h.b16 %v125
      %v273 = vunpack.c.l.b16 %v126
      %v274 = vunpack.c.h.b16 %v126
      %v275 = vunpack.c.l.b16 %v127
      %v276 = vunpack.c.h.b16 %v127
      %v277 = vunpack.c.l.b16 %v128
      %v278 = vunpack.c.h.b16 %v128
      %v279 = vunpack.c.l.b16 %v129
      %v280 = vunpack.c.h.b16 %v129
      %v281 = vunpack.c.l.b16 %v130
      %v282 = vunpack.c.h.b16 %v130
      %v283 = vunpack.c.l.b16 %v131
      %v284 = vunpack.c.h.b16 %v131
      %v285 = vunpack.c.l.b16 %v132
      %v286 = vunpack.c.h.b16 %v132
      %v287 = vunpack.c.l.b16 %v133
      %v288 = vunpack.c.h.b16 %v133
      %v289 = vunpack.c.l.b16 %v134
      %v290 = vunpack.c.h.b16 %v134
      %v291 = vunpack.c.l.b16 %v135
      %v292 = vunpack.c.h.b16 %v135
      %v293 = vpack.c.b16 %v233, %v229
      %v294 = vpack.c.b16 %v234, %v230
      %v295 = vpack.c.b16 %v235, %v231
      %v296 = vpack.c.b16 %v236, %v232
      %v297 = vpack.c.b16 %v241, %v237
      %v298 = vpack.c.b16 %v242, %v238
      %v299 = vpack.c.b16 %v243, %v239
      %v300 = vpack.c.b16 %v244, %v240
      %v301 = vpack.c.b16 %v249, %v245
      %v302 = vpack.c.b16 %v250, %v246
      %v303 = vpack.c.b16 %v251, %v247
      %v304 = vpack.c.b16 %v252, %v248
      %v305 = vpack.c.b16 %v257, %v253
      %v306 = vpack.c.b16 %v258, %v254
      %v307 = vpack.c.b16 %v259, %v255
      %v308 = vpack.c.b16 %v260, %v256
      %v309 = vpack.c.b16 %v265, %v261
      %v310 = vpack.c.b16 %v266, %v262
      %v311 = vpack.c.b16 %v267, %v263
      %v312 = vpack.c.b16 %v268, %v264
      %v313 = vpack.c.b16 %v273, %v269
      %v314 = vpack.c.b16 %v274, %v270
      %v315 = vpack.c.b16 %v275, %v271
      %v316 = vpack.c.b16 %v276, %v272
      %v317 = vpack.c.b16 %v281, %v277
      %v318 = vpack.c.b16 %v282, %v278
      %v319 = vpack.c.b16 %v283, %v279
      %v320 = vpack.c.b16 %v284, %v280
      %v321 = vpack.c.b16 %v289, %v285
      %v322 = vpack.c.b16 %v290, %v286
      %v323 = vpack.c.b16 %v291, %v287
      %v324 = vpack.c.b16 %v292, %v288
      %357 = vmatprep.subr.bf16.mxu0 %v322
      %358 = vmatpush1.bf16.msra.mxu0 %v321
      %359 = vmatprep.subr.bf16.mxu0 %v318
      %360 = vmatpush1.bf16.msra.mxu0 %v317
      %361 = vmatprep.subr.bf16.mxu0 %v314
      %362 = vmatpush1.bf16.msra.mxu0 %v313
      %363 = vmatprep.subr.bf16.mxu0 %v310
      %364 = vmatpush1.bf16.msra.mxu0 %v309
      %365 = vmatprep.subr.bf16.mxu0 %v306
      %366 = vmatpush1.bf16.msra.mxu0 %v305
      %367 = vmatprep.subr.bf16.mxu0 %v302
      %368 = vmatpush1.bf16.msra.mxu0 %v301
      %369 = vmatprep.subr.bf16.mxu0 %v298
      %370 = vmatpush1.bf16.msra.mxu0 %v297
      %371 = vmatprep.subr.bf16.mxu0 %v294
      %372 = vmatpush1.bf16.msra.mxu0 %v293
      %373 = vmatprep.subr.bf16.mxu0 0
      %374 = vmatpush2.bf16.msra.mxu0 0
      %375 = vmatprep.subr.bf16.mxu0 0
      %376 = vmatpush2.bf16.msra.mxu0 0
      %377 = vmatprep.subr.bf16.mxu0 0
      %378 = vmatpush2.bf16.msra.mxu0 0
      %379 = vmatprep.subr.bf16.mxu0 0
      %380 = vmatpush2.bf16.msra.mxu0 0
      %381 = vmatprep.subr.bf16.mxu0 0
      %382 = vmatpush2.bf16.msra.mxu0 0
      %383 = vmatprep.subr.bf16.mxu0 0
      %384 = vmatpush2.bf16.msra.mxu0 0
      %385 = vmatprep.subr.bf16.mxu0 0
      %386 = vmatpush2.bf16.msra.mxu0 0
      %387 = vmatprep.subr.bf16.mxu0 0
      %388 = vmatpush2.bf16.msra.mxu0 0
      %389 = vmatprep.mubr.bf16.mxu0 0
      %390 = vmatmul.mubr.bf16.gmra.mxu0 %v175
      %v391 = vpop.f32.mrf.mxu0
      %v392 = vadd.f32 %v180, %v391
      %v393 = vpop.f32.mrf.mxu0
      %v394 = vadd.f32 %v184, %v393
      %v395 = vpop.f32.mrf.mxu0
      %v396 = vadd.f32 %v180, %v395
      %v397 = vpop.f32.mrf.mxu0
      %v398 = vadd.f32 %v184, %v397
      %399 = vdwg.mxu0
      %400 = vmatprep.subr.bf16.mxu0 %v324
      %401 = vmatpush1.bf16.msra.mxu0 %v323
      %402 = vmatprep.subr.bf16.mxu0 %v320
      %403 = vmatpush1.bf16.msra.mxu0 %v319
      %404 = vmatprep.subr.bf16.mxu0 %v316
      %405 = vmatpush1.bf16.msra.mxu0 %v315
      %406 = vmatprep.subr.bf16.mxu0 %v312
      %407 = vmatpush1.bf16.msra.mxu0 %v311
      %408 = vmatprep.subr.bf16.mxu0 %v308
      %409 = vmatpush1.bf16.msra.mxu0 %v307
      %410 = vmatprep.subr.bf16.mxu0 %v304
      %411 = vmatpush1.bf16.msra.mxu0 %v303
      %412 = vmatprep.subr.bf16.mxu0 %v300
      %413 = vmatpush1.bf16.msra.mxu0 %v299
      %414 = vmatprep.subr.bf16.mxu0 %v296
      %415 = vmatpush1.bf16.msra.mxu0 %v295
      %416 = vmatprep.subr.bf16.mxu0 0
      %417 = vmatpush2.bf16.msra.mxu0 0
      %418 = vmatprep.subr.bf16.mxu0 0
      %419 = vmatpush2.bf16.msra.mxu0 0
      %420 = vmatprep.subr.bf16.mxu0 0
      %421 = vmatpush2.bf16.msra.mxu0 0
      %422 = vmatprep.subr.bf16.mxu0 0
      %423 = vmatpush2.bf16.msra.mxu0 0
      %424 = vmatprep.subr.bf16.mxu0 0
      %425 = vmatpush2.bf16.msra.mxu0 0
      %426 = vmatprep.subr.bf16.mxu0 0
      %427 = vmatpush2.bf16.msra.mxu0 0
      %428 = vmatprep.subr.bf16.mxu0 0
      %429 = vmatpush2.bf16.msra.mxu0 0
      %430 = vmatprep.subr.bf16.mxu0 0
      %431 = vmatpush2.bf16.msra.mxu0 0
      %432 = vmatprep.mubr.bf16.mxu0 0
      %433 = vmatmul.mubr.bf16.gmra.mxu0 %v175
      %v434 = vpop.f32.mrf.mxu0
      %v435 = vadd.f32 %v188, %v434
      %v436 = vpop.f32.mrf.mxu0
      %v437 = vadd.f32 %v192, %v436
      %v438 = vpop.f32.mrf.mxu0
      %v439 = vadd.f32 %v188, %v438
      %v440 = vpop.f32.mrf.mxu0
      %v441 = vadd.f32 %v192, %v440
      %442 = vdwg.mxu0
      %443 = vst [vmem:[#allocation3] sm:$0xff] %v392
      %444 = vst [vmem:[#allocation3 + $0x8] sm:$0xff] %v394
      %445 = vst [vmem:[#allocation3 + $0x10] sm:$0xff] %v435
      %446 = vst [vmem:[#allocation3 + $0x18] sm:$0xff] %v437
      %447 = vst [vmem:[#allocation3 + $0x20] sm:$0xff] %v396
      %448 = vst [vmem:[#allocation3 + $0x28] sm:$0xff] %v398
      %449 = vst [vmem:[#allocation3 + $0x30] sm:$0xff] %v439
      %450 = vst [vmem:[#allocation3 + $0x38] sm:$0xff] %v441
      %v451 = vld [vmem:[#allocation3] sm:$0x3]
      %v452 = vld [vmem:[#allocation3 + $0x8] sm:$0x3]
      %v453 = vld [vmem:[#allocation3 + $0x10] sm:$0x3]
      %v454 = vld [vmem:[#allocation3 + $0x18] sm:$0x3]
      %v487 = vunpack.c.l.b16 %v138
      %v488 = vunpack.c.h.b16 %v138
      %v489 = vunpack.c.l.b16 %v139
      %v490 = vunpack.c.h.b16 %v139
      %v491 = vunpack.c.l.b16 %v140
      %v492 = vunpack.c.h.b16 %v140
      %v493 = vunpack.c.l.b16 %v141
      %v494 = vunpack.c.h.b16 %v141
      %v495 = vunpack.c.l.b16 %v142
      %v496 = vunpack.c.h.b16 %v142
      %v497 = vunpack.c.l.b16 %v143
      %v498 = vunpack.c.h.b16 %v143
      %v499 = vunpack.c.l.b16 %v144
      %v500 = vunpack.c.h.b16 %v144
      %v501 = vunpack.c.l.b16 %v145
      %v502 = vunpack.c.h.b16 %v145
      %v503 = vunpack.c.l.b16 %v146
      %v504 = vunpack.c.h.b16 %v146
      %v505 = vunpack.c.l.b16 %v147
      %v506 = vunpack.c.h.b16 %v147
      %v507 = vunpack.c.l.b16 %v148
      %v508 = vunpack.c.h.b16 %v148
      %v509 = vunpack.c.l.b16 %v149
      %v510 = vunpack.c.h.b16 %v149
      %v511 = vunpack.c.l.b16 %v150
      %v512 = vunpack.c.h.b16 %v150
      %v513 = vunpack.c.l.b16 %v151
      %v514 = vunpack.c.h.b16 %v151
      %v515 = vunpack.c.l.b16 %v152
      %v516 = vunpack.c.h.b16 %v152
      %v517 = vunpack.c.l.b16 %v153
      %v518 = vunpack.c.h.b16 %v153
      %v519 = vunpack.c.l.b16 %v154
      %v520 = vunpack.c.h.b16 %v154
      %v521 = vunpack.c.l.b16 %v155
      %v522 = vunpack.c.h.b16 %v155
      %v523 = vunpack.c.l.b16 %v156
      %v524 = vunpack.c.h.b16 %v156
      %v525 = vunpack.c.l.b16 %v157
      %v526 = vunpack.c.h.b16 %v157
      %v527 = vunpack.c.l.b16 %v158
      %v528 = vunpack.c.h.b16 %v158
      %v529 = vunpack.c.l.b16 %v159
      %v530 = vunpack.c.h.b16 %v159
      %v531 = vunpack.c.l.b16 %v160
      %v532 = vunpack.c.h.b16 %v160
      %v533 = vunpack.c.l.b16 %v161
      %v534 = vunpack.c.h.b16 %v161
      %v535 = vunpack.c.l.b16 %v162
      %v536 = vunpack.c.h.b16 %v162
      %v537 = vunpack.c.l.b16 %v163
      %v538 = vunpack.c.h.b16 %v163
      %v539 = vunpack.c.l.b16 %v164
      %v540 = vunpack.c.h.b16 %v164
      %v541 = vunpack.c.l.b16 %v165
      %v542 = vunpack.c.h.b16 %v165
      %v543 = vunpack.c.l.b16 %v166
      %v544 = vunpack.c.h.b16 %v166
      %v545 = vunpack.c.l.b16 %v167
      %v546 = vunpack.c.h.b16 %v167
      %v547 = vunpack.c.l.b16 %v168
      %v548 = vunpack.c.h.b16 %v168
      %v549 = vunpack.c.l.b16 %v169
      %v550 = vunpack.c.h.b16 %v169
      %v551 = vpack.c.b16 %v491, %v487
      %v552 = vpack.c.b16 %v492, %v488
      %v553 = vpack.c.b16 %v493, %v489
      %v554 = vpack.c.b16 %v494, %v490
      %v555 = vpack.c.b16 %v499, %v495
      %v556 = vpack.c.b16 %v500, %v496
      %v557 = vpack.c.b16 %v501, %v497
      %v558 = vpack.c.b16 %v502, %v498
      %v559 = vpack.c.b16 %v507, %v503
      %v560 = vpack.c.b16 %v508, %v504
      %v561 = vpack.c.b16 %v509, %v505
      %v562 = vpack.c.b16 %v510, %v506
      %v563 = vpack.c.b16 %v515, %v511
      %v564 = vpack.c.b16 %v516, %v512
      %v565 = vpack.c.b16 %v517, %v513
      %v566 = vpack.c.b16 %v518, %v514
      %v567 = vpack.c.b16 %v523, %v519
      %v568 = vpack.c.b16 %v524, %v520
      %v569 = vpack.c.b16 %v525, %v521
      %v570 = vpack.c.b16 %v526, %v522
      %v571 = vpack.c.b16 %v531, %v527
      %v572 = vpack.c.b16 %v532, %v528
      %v573 = vpack.c.b16 %v533, %v529
      %v574 = vpack.c.b16 %v534, %v530
      %v575 = vpack.c.b16 %v539, %v535
      %v576 = vpack.c.b16 %v540, %v536
      %v577 = vpack.c.b16 %v541, %v537
      %v578 = vpack.c.b16 %v542, %v538
      %v579 = vpack.c.b16 %v547, %v543
      %v580 = vpack.c.b16 %v548, %v544
      %v581 = vpack.c.b16 %v549, %v545
      %v582 = vpack.c.b16 %v550, %v546
      %615 = vmatprep.subr.bf16.mxu0 %v580
      %616 = vmatpush1.bf16.msra.mxu0 %v579
      %617 = vmatprep.subr.bf16.mxu0 %v576
      %618 = vmatpush1.bf16.msra.mxu0 %v575
      %619 = vmatprep.subr.bf16.mxu0 %v572
      %620 = vmatpush1.bf16.msra.mxu0 %v571
      %621 = vmatprep.subr.bf16.mxu0 %v568
      %622 = vmatpush1.bf16.msra.mxu0 %v567
      %623 = vmatprep.subr.bf16.mxu0 %v564
      %624 = vmatpush1.bf16.msra.mxu0 %v563
      %625 = vmatprep.subr.bf16.mxu0 %v560
      %626 = vmatpush1.bf16.msra.mxu0 %v559
      %627 = vmatprep.subr.bf16.mxu0 %v556
      %628 = vmatpush1.bf16.msra.mxu0 %v555
      %629 = vmatprep.subr.bf16.mxu0 %v552
      %630 = vmatpush1.bf16.msra.mxu0 %v551
      %631 = vmatprep.subr.bf16.mxu0 0
      %632 = vmatpush2.bf16.msra.mxu0 0
      %633 = vmatprep.subr.bf16.mxu0 0
      %634 = vmatpush2.bf16.msra.mxu0 0
      %635 = vmatprep.subr.bf16.mxu0 0
      %636 = vmatpush2.bf16.msra.mxu0 0
      %637 = vmatprep.subr.bf16.mxu0 0
      %638 = vmatpush2.bf16.msra.mxu0 0
      %639 = vmatprep.subr.bf16.mxu0 0
      %640 = vmatpush2.bf16.msra.mxu0 0
      %641 = vmatprep.subr.bf16.mxu0 0
      %642 = vmatpush2.bf16.msra.mxu0 0
      %643 = vmatprep.subr.bf16.mxu0 0
      %644 = vmatpush2.bf16.msra.mxu0 0
      %645 = vmatprep.subr.bf16.mxu0 0
      %646 = vmatpush2.bf16.msra.mxu0 0
      %647 = vmatprep.mubr.bf16.mxu0 0
      %648 = vmatmul.mubr.bf16.gmra.mxu0 0
      %v649 = vpop.f32.mrf.mxu0
      %v650 = vadd.f32 0.0, %v649
      %v651 = vpop.f32.mrf.mxu0
      %v652 = vadd.f32 0.0, %v651
      %v653 = vpop.f32.mrf.mxu0
      %v654 = vpop.f32.mrf.mxu0
      %655 = vdwg.mxu0
      %656 = vmatprep.subr.bf16.mxu0 %v582
      %657 = vmatpush1.bf16.msra.mxu0 %v581
      %658 = vmatprep.subr.bf16.mxu0 %v578
      %659 = vmatpush1.bf16.msra.mxu0 %v577
      %660 = vmatprep.subr.bf16.mxu0 %v574
      %661 = vmatpush1.bf16.msra.mxu0 %v573
      %662 = vmatprep.subr.bf16.mxu0 %v570
      %663 = vmatpush1.bf16.msra.mxu0 %v569
      %664 = vmatprep.subr.bf16.mxu0 %v566
      %665 = vmatpush1.bf16.msra.mxu0 %v565
      %666 = vmatprep.subr.bf16.mxu0 %v562
      %667 = vmatpush1.bf16.msra.mxu0 %v561
      %668 = vmatprep.subr.bf16.mxu0 %v558
      %669 = vmatpush1.bf16.msra.mxu0 %v557
      %670 = vmatprep.subr.bf16.mxu0 %v554
      %671 = vmatpush1.bf16.msra.mxu0 %v553
      %672 = vmatprep.subr.bf16.mxu0 0
      %673 = vmatpush2.bf16.msra.mxu0 0
      %674 = vmatprep.subr.bf16.mxu0 0
      %675 = vmatpush2.bf16.msra.mxu0 0
      %676 = vmatprep.subr.bf16.mxu0 0
      %677 = vmatpush2.bf16.msra.mxu0 0
      %678 = vmatprep.subr.bf16.mxu0 0
      %679 = vmatpush2.bf16.msra.mxu0 0
      %680 = vmatprep.subr.bf16.mxu0 0
      %681 = vmatpush2.bf16.msra.mxu0 0
      %682 = vmatprep.subr.bf16.mxu0 0
      %683 = vmatpush2.bf16.msra.mxu0 0
      %684 = vmatprep.subr.bf16.mxu0 0
      %685 = vmatpush2.bf16.msra.mxu0 0
      %686 = vmatprep.subr.bf16.mxu0 0
      %687 = vmatpush2.bf16.msra.mxu0 0
      %688 = vmatprep.mubr.bf16.mxu0 0
      %689 = vmatmul.mubr.bf16.gmra.mxu0 0
      %v690 = vpop.f32.mrf.mxu0
      %v691 = vadd.f32 0.0, %v690
      %v692 = vpop.f32.mrf.mxu0
      %v693 = vadd.f32 0.0, %v692
      %v694 = vpop.f32.mrf.mxu0
      %v695 = vpop.f32.mrf.mxu0
      %696 = vdwg.mxu0
      %v697 = vadd.f32 %v451, %v650
      %v698 = vadd.f32 %v452, %v652
      %v699 = vadd.f32 %v453, %v691
      %v700 = vadd.f32 %v454, %v693
      %v701 = vxor.u32 %v697, 2147483648
      %v702 = vxor.u32 %v698, 2147483648
      %v703 = vxor.u32 %v699, 2147483648
      %v704 = vmul.f32 %v701, 1.442695
      %v705 = vpow.pop %v704
      %v706 = vmul.f32 %v702, 1.442695
      %v707 = vpow.pop %v706
      %v708 = vmul.f32 %v703, 1.442695
      %v709 = vpow.pop %v708
      %v710 = vadd.f32 %v705, 1.0
      %v711 = vadd.f32 %v707, 1.0
      %v712 = vadd.f32 %v709, 1.0
      %v713 = vrcp.pop %v710
      %v714 = vmul.f32 1.0, %v713
      %v715 = vrcp.pop %v711
      %v716 = vmul.f32 1.0, %v715
      %v717 = vrcp.pop %v712
      %v718 = vmul.f32 1.0, %v717
      %v719 = vtanh.pop %v700
      %v720 = vmul.f32 %v716, 0.0
      %v721 = vmul.f32 %v714, %v719
      %v722 = vadd.f32 %v720, %v721
      %v723 = vtanh.pop %v722
      %v724 = vmul.f32 %v718, %v723
      %725 = vst [vmem:[#allocation2] sm:$0x3] %v724
      %v726 = vld [vmem:[#allocation3] sm:$0xc]
      %v727 = vld [vmem:[#allocation3 + $0x8] sm:$0xc]
      %v728 = vld [vmem:[#allocation3 + $0x10] sm:$0xc]
      %v729 = vld [vmem:[#allocation3 + $0x18] sm:$0xc]
      %v730 = vpack.c.bf16 %v724, %v724
      %731 = vmatprep.subr.bf16.mxu0 %v580
      %732 = vmatpush1.bf16.msra.mxu0 %v579
      %733 = vmatprep.subr.bf16.mxu0 %v576
      %734 = vmatpush1.bf16.msra.mxu0 %v575
      %735 = vmatprep.subr.bf16.mxu0 %v572
      %736 = vmatpush1.bf16.msra.mxu0 %v571
      %737 = vmatprep.subr.bf16.mxu0 %v568
      %738 = vmatpush1.bf16.msra.mxu0 %v567
      %739 = vmatprep.subr.bf16.mxu0 %v564
      %740 = vmatpush1.bf16.msra.mxu0 %v563
      %741 = vmatprep.subr.bf16.mxu0 %v560
      %742 = vmatpush1.bf16.msra.mxu0 %v559
      %743 = vmatprep.subr.bf16.mxu0 %v556
      %744 = vmatpush1.bf16.msra.mxu0 %v555
      %745 = vmatprep.subr.bf16.mxu0 %v552
      %746 = vmatpush1.bf16.msra.mxu0 %v551
      %747 = vmatprep.subr.bf16.mxu0 0
      %748 = vmatpush2.bf16.msra.mxu0 0
      %749 = vmatprep.subr.bf16.mxu0 0
      %750 = vmatpush2.bf16.msra.mxu0 0
      %751 = vmatprep.subr.bf16.mxu0 0
      %752 = vmatpush2.bf16.msra.mxu0 0
      %753 = vmatprep.subr.bf16.mxu0 0
      %754 = vmatpush2.bf16.msra.mxu0 0
      %755 = vmatprep.subr.bf16.mxu0 0
      %756 = vmatpush2.bf16.msra.mxu0 0
      %757 = vmatprep.subr.bf16.mxu0 0
      %758 = vmatpush2.bf16.msra.mxu0 0
      %759 = vmatprep.subr.bf16.mxu0 0
      %760 = vmatpush2.bf16.msra.mxu0 0
      %761 = vmatprep.subr.bf16.mxu0 0
      %762 = vmatpush2.bf16.msra.mxu0 0
      %763 = vmatprep.mubr.bf16.mxu0 0
      %764 = vmatmul.mubr.bf16.gmra.mxu0 %v730
      %v765 = vpop.f32.mrf.mxu0
      %v766 = vadd.f32 0.0, %v765
      %v767 = vpop.f32.mrf.mxu0
      %v768 = vadd.f32 0.0, %v767
      %v769 = vpop.f32.mrf.mxu0
      %v770 = vpop.f32.mrf.mxu0
      %771 = vdwg.mxu0
      %772 = vmatprep.subr.bf16.mxu0 %v582
      %773 = vmatpush1.bf16.msra.mxu0 %v581
      %774 = vmatprep.subr.bf16.mxu0 %v578
      %775 = vmatpush1.bf16.msra.mxu0 %v577
      %776 = vmatprep.subr.bf16.mxu0 %v574
      %777 = vmatpush1.bf16.msra.mxu0 %v573
      %778 = vmatprep.subr.bf16.mxu0 %v570
      %779 = vmatpush1.bf16.msra.mxu0 %v569
      %780 = vmatprep.subr.bf16.mxu0 %v566
      %781 = vmatpush1.bf16.msra.mxu0 %v565
      %782 = vmatprep.subr.bf16.mxu0 %v562
      %783 = vmatpush1.bf16.msra.mxu0 %v561
      %784 = vmatprep.subr.bf16.mxu0 %v558
      %785 = vmatpush1.bf16.msra.mxu0 %v557
      %786 = vmatprep.subr.bf16.mxu0 %v554
      %787 = vmatpush1.bf16.msra.mxu0 %v553
      %788 = vmatprep.subr.bf16.mxu0 0
      %789 = vmatpush2.bf16.msra.mxu0 0
      %790 = vmatprep.subr.bf16.mxu0 0
      %791 = vmatpush2.bf16.msra.mxu0 0
      %792 = vmatprep.subr.bf16.mxu0 0
      %793 = vmatpush2.bf16.msra.mxu0 0
      %794 = vmatprep.subr.bf16.mxu0 0
      %795 = vmatpush2.bf16.msra.mxu0 0
      %796 = vmatprep.subr.bf16.mxu0 0
      %797 = vmatpush2.bf16.msra.mxu0 0
      %798 = vmatprep.subr.bf16.mxu0 0
      %799 = vmatpush2.bf16.msra.mxu0 0
      %800 = vmatprep.subr.bf16.mxu0 0
      %801 = vmatpush2.bf16.msra.mxu0 0
      %802 = vmatprep.subr.bf16.mxu0 0
      %803 = vmatpush2.bf16.msra.mxu0 0
      %804 = vmatprep.mubr.bf16.mxu0 0
      %805 = vmatmul.mubr.bf16.gmra.mxu0 %v730
      %v806 = vpop.f32.mrf.mxu0
      %v807 = vadd.f32 0.0, %v806
      %v808 = vpop.f32.mrf.mxu0
      %v809 = vadd.f32 0.0, %v808
      %v810 = vpop.f32.mrf.mxu0
      %v811 = vpop.f32.mrf.mxu0
      %812 = vdwg.mxu0
      %v817 = vrot.slane %v766, 6
      %v818 = vrot.slane %v768, 6
      %v819 = vrot.slane %v807, 6
      %v820 = vrot.slane %v809, 6
      %v825 = vadd.f32 %v726, %v817
      %v826 = vadd.f32 %v727, %v818
      %v827 = vadd.f32 %v728, %v819
      %v828 = vadd.f32 %v729, %v820
      %v829 = vxor.u32 %v825, 2147483648
      %v830 = vxor.u32 %v826, 2147483648
      %v831 = vxor.u32 %v827, 2147483648
      %v832 = vmul.f32 %v829, 1.442695
      %v833 = vpow.pop %v832
      %v834 = vmul.f32 %v830, 1.442695
      %v835 = vpow.pop %v834
      %v836 = vmul.f32 %v831, 1.442695
      %v837 = vpow.pop %v836
      %v838 = vadd.f32 %v833, 1.0
      %v839 = vadd.f32 %v835, 1.0
      %v840 = vadd.f32 %v837, 1.0
      %v841 = vrcp.pop %v838
      %v842 = vmul.f32 1.0, %v841
      %v843 = vrcp.pop %v839
      %v844 = vmul.f32 1.0, %v843
      %v845 = vrcp.pop %v840
      %v846 = vmul.f32 1.0, %v845
      %v847 = vtanh.pop %v828
      %v849 = vrot.slane %v722, 6
      %v851 = vmul.f32 %v844, %v849
      %v852 = vmul.f32 %v842, %v847
      %v853 = vadd.f32 %v851, %v852
      %v854 = vtanh.pop %v853
      %v855 = vmul.f32 %v846, %v854
      %856 = vst [vmem:[#allocation2] sm:$0xc] %v855
      %v857 = vld [vmem:[#allocation3] sm:$0x30]
      %v858 = vld [vmem:[#allocation3 + $0x8] sm:$0x30]
      %v859 = vld [vmem:[#allocation3 + $0x10] sm:$0x30]
      %v860 = vld [vmem:[#allocation3 + $0x18] sm:$0x30]
      %v861 = vpack.c.bf16 %v855, %v855
      %v863 = vrot.slane %v861, 1
      %865 = vmatprep.subr.bf16.mxu0 %v580
      %866 = vmatpush1.bf16.msra.mxu0 %v579
      %867 = vmatprep.subr.bf16.mxu0 %v576
      %868 = vmatpush1.bf16.msra.mxu0 %v575
      %869 = vmatprep.subr.bf16.mxu0 %v572
      %870 = vmatpush1.bf16.msra.mxu0 %v571
      %871 = vmatprep.subr.bf16.mxu0 %v568
      %872 = vmatpush1.bf16.msra.mxu0 %v567
      %873 = vmatprep.subr.bf16.mxu0 %v564
      %874 = vmatpush1.bf16.msra.mxu0 %v563
      %875 = vmatprep.subr.bf16.mxu0 %v560
      %876 = vmatpush1.bf16.msra.mxu0 %v559
      %877 = vmatprep.subr.bf16.mxu0 %v556
      %878 = vmatpush1.bf16.msra.mxu0 %v555
      %879 = vmatprep.subr.bf16.mxu0 %v552
      %880 = vmatpush1.bf16.msra.mxu0 %v551
      %881 = vmatprep.subr.bf16.mxu0 0
      %882 = vmatpush2.bf16.msra.mxu0 0
      %883 = vmatprep.subr.bf16.mxu0 0
      %884 = vmatpush2.bf16.msra.mxu0 0
      %885 = vmatprep.subr.bf16.mxu0 0
      %886 = vmatpush2.bf16.msra.mxu0 0
      %887 = vmatprep.subr.bf16.mxu0 0
      %888 = vmatpush2.bf16.msra.mxu0 0
      %889 = vmatprep.subr.bf16.mxu0 0
      %890 = vmatpush2.bf16.msra.mxu0 0
      %891 = vmatprep.subr.bf16.mxu0 0
      %892 = vmatpush2.bf16.msra.mxu0 0
      %893 = vmatprep.subr.bf16.mxu0 0
      %894 = vmatpush2.bf16.msra.mxu0 0
      %895 = vmatprep.subr.bf16.mxu0 0
      %896 = vmatpush2.bf16.msra.mxu0 0
      %897 = vmatprep.mubr.bf16.mxu0 0
      %898 = vmatmul.mubr.bf16.gmra.mxu0 %v863
      %v899 = vpop.f32.mrf.mxu0
      %v900 = vadd.f32 0.0, %v899
      %v901 = vpop.f32.mrf.mxu0
      %v902 = vadd.f32 0.0, %v901
      %v903 = vpop.f32.mrf.mxu0
      %v904 = vpop.f32.mrf.mxu0
      %905 = vdwg.mxu0
      %906 = vmatprep.subr.bf16.mxu0 %v582
      %907 = vmatpush1.bf16.msra.mxu0 %v581
      %908 = vmatprep.subr.bf16.mxu0 %v578
      %909 = vmatpush1.bf16.msra.mxu0 %v577
      %910 = vmatprep.subr.bf16.mxu0 %v574
      %911 = vmatpush1.bf16.msra.mxu0 %v573
      %912 = vmatprep.subr.bf16.mxu0 %v570
      %913 = vmatpush1.bf16.msra.mxu0 %v569
      %914 = vmatprep.subr.bf16.mxu0 %v566
      %915 = vmatpush1.bf16.msra.mxu0 %v565
      %916 = vmatprep.subr.bf16.mxu0 %v562
      %917 = vmatpush1.bf16.msra.mxu0 %v561
      %918 = vmatprep.subr.bf16.mxu0 %v558
      %919 = vmatpush1.bf16.msra.mxu0 %v557
      %920 = vmatprep.subr.bf16.mxu0 %v554
      %921 = vmatpush1.bf16.msra.mxu0 %v553
      %922 = vmatprep.subr.bf16.mxu0 0
      %923 = vmatpush2.bf16.msra.mxu0 0
      %924 = vmatprep.subr.bf16.mxu0 0
      %925 = vmatpush2.bf16.msra.mxu0 0
      %926 = vmatprep.subr.bf16.mxu0 0
      %927 = vmatpush2.bf16.msra.mxu0 0
      %928 = vmatprep.subr.bf16.mxu0 0
      %929 = vmatpush2.bf16.msra.mxu0 0
      %930 = vmatprep.subr.bf16.mxu0 0
      %931 = vmatpush2.bf16.msra.mxu0 0
      %932 = vmatprep.subr.bf16.mxu0 0
      %933 = vmatpush2.bf16.msra.mxu0 0
      %934 = vmatprep.subr.bf16.mxu0 0
      %935 = vmatpush2.bf16.msra.mxu0 0
      %936 = vmatprep.subr.bf16.mxu0 0
      %937 = vmatpush2.bf16.msra.mxu0 0
      %938 = vmatprep.mubr.bf16.mxu0 0
      %939 = vmatmul.mubr.bf16.gmra.mxu0 %v863
      %v940 = vpop.f32.mrf.mxu0
      %v941 = vadd.f32 0.0, %v940
      %v942 = vpop.f32.mrf.mxu0
      %v943 = vadd.f32 0.0, %v942
      %v944 = vpop.f32.mrf.mxu0
      %v945 = vpop.f32.mrf.mxu0
      %946 = vdwg.mxu0
      %v951 = vrot.slane %v900, 4
      %v952 = vrot.slane %v902, 4
      %v953 = vrot.slane %v941, 4
      %v954 = vrot.slane %v943, 4
      %v959 = vadd.f32 %v857, %v951
      %v960 = vadd.f32 %v858, %v952
      %v961 = vadd.f32 %v859, %v953
      %v962 = vadd.f32 %v860, %v954
      %v963 = vxor.u32 %v959, 2147483648
      %v964 = vxor.u32 %v960, 2147483648
      %v965 = vxor.u32 %v961, 2147483648
      %v966 = vmul.f32 %v963, 1.442695
      %v967 = vpow.pop %v966
      %v968 = vmul.f32 %v964, 1.442695
      %v969 = vpow.pop %v968
      %v970 = vmul.f32 %v965, 1.442695
      %v971 = vpow.pop %v970
      %v972 = vadd.f32 %v967, 1.0
      %v973 = vadd.f32 %v969, 1.0
      %v974 = vadd.f32 %v971, 1.0
      %v975 = vrcp.pop %v972
      %v976 = vmul.f32 1.0, %v975
      %v977 = vrcp.pop %v973
      %v978 = vmul.f32 1.0, %v977
      %v979 = vrcp.pop %v974
      %v980 = vmul.f32 1.0, %v979
      %v981 = vtanh.pop %v962
      %v983 = vrot.slane %v853, 6
      %v985 = vmul.f32 %v978, %v983
      %v986 = vmul.f32 %v976, %v981
      %v987 = vadd.f32 %v985, %v986
      %v988 = vtanh.pop %v987
      %v989 = vmul.f32 %v980, %v988
      %990 = vst [vmem:[#allocation2] sm:$0x30] %v989
      %v991 = vld [vmem:[#allocation3] sm:$0xc0]
      %v992 = vld [vmem:[#allocation3 + $0x8] sm:$0xc0]
      %v993 = vld [vmem:[#allocation3 + $0x10] sm:$0xc0]
      %v994 = vld [vmem:[#allocation3 + $0x18] sm:$0xc0]
      %v995 = vpack.c.bf16 %v989, %v989
      %v997 = vrot.slane %v995, 2
      %999 = vmatprep.subr.bf16.mxu0 %v580
      %1000 = vmatpush1.bf16.msra.mxu0 %v579
      %1001 = vmatprep.subr.bf16.mxu0 %v576
      %1002 = vmatpush1.bf16.msra.mxu0 %v575
      %1003 = vmatprep.subr.bf16.mxu0 %v572
      %1004 = vmatpush1.bf16.msra.mxu0 %v571
      %1005 = vmatprep.subr.bf16.mxu0 %v568
      %1006 = vmatpush1.bf16.msra.mxu0 %v567
      %1007 = vmatprep.subr.bf16.mxu0 %v564
      %1008 = vmatpush1.bf16.msra.mxu0 %v563
      %1009 = vmatprep.subr.bf16.mxu0 %v560
      %1010 = vmatpush1.bf16.msra.mxu0 %v559
      %1011 = vmatprep.subr.bf16.mxu0 %v556
      %1012 = vmatpush1.bf16.msra.mxu0 %v555
      %1013 = vmatprep.subr.bf16.mxu0 %v552
      %1014 = vmatpush1.bf16.msra.mxu0 %v551
      %1015 = vmatprep.subr.bf16.mxu0 0
      %1016 = vmatpush2.bf16.msra.mxu0 0
      %1017 = vmatprep.subr.bf16.mxu0 0
      %1018 = vmatpush2.bf16.msra.mxu0 0
      %1019 = vmatprep.subr.bf16.mxu0 0
      %1020 = vmatpush2.bf16.msra.mxu0 0
      %1021 = vmatprep.subr.bf16.mxu0 0
      %1022 = vmatpush2.bf16.msra.mxu0 0
      %1023 = vmatprep.subr.bf16.mxu0 0
      %1024 = vmatpush2.bf16.msra.mxu0 0
      %1025 = vmatprep.subr.bf16.mxu0 0
      %1026 = vmatpush2.bf16.msra.mxu0 0
      %1027 = vmatprep.subr.bf16.mxu0 0
      %1028 = vmatpush2.bf16.msra.mxu0 0
      %1029 = vmatprep.subr.bf16.mxu0 0
      %1030 = vmatpush2.bf16.msra.mxu0 0
      %1031 = vmatprep.mubr.bf16.mxu0 0
      %1032 = vmatmul.mubr.bf16.gmra.mxu0 %v997
      %v1033 = vpop.f32.mrf.mxu0
      %v1034 = vadd.f32 0.0, %v1033
      %v1035 = vpop.f32.mrf.mxu0
      %v1036 = vadd.f32 0.0, %v1035
      %v1037 = vpop.f32.mrf.mxu0
      %v1038 = vpop.f32.mrf.mxu0
      %1039 = vdwg.mxu0
      %1040 = vmatprep.subr.bf16.mxu0 %v582
      %1041 = vmatpush1.bf16.msra.mxu0 %v581
      %1042 = vmatprep.subr.bf16.mxu0 %v578
      %1043 = vmatpush1.bf16.msra.mxu0 %v577
      %1044 = vmatprep.subr.bf16.mxu0 %v574
      %1045 = vmatpush1.bf16.msra.mxu0 %v573
      %1046 = vmatprep.subr.bf16.mxu0 %v570
      %1047 = vmatpush1.bf16.msra.mxu0 %v569
      %1048 = vmatprep.subr.bf16.mxu0 %v566
      %1049 = vmatpush1.bf16.msra.mxu0 %v565
      %1050 = vmatprep.subr.bf16.mxu0 %v562
      %1051 = vmatpush1.bf16.msra.mxu0 %v561
      %1052 = vmatprep.subr.bf16.mxu0 %v558
      %1053 = vmatpush1.bf16.msra.mxu0 %v557
      %1054 = vmatprep.subr.bf16.mxu0 %v554
      %1055 = vmatpush1.bf16.msra.mxu0 %v553
      %1056 = vmatprep.subr.bf16.mxu0 0
      %1057 = vmatpush2.bf16.msra.mxu0 0
      %1058 = vmatprep.subr.bf16.mxu0 0
      %1059 = vmatpush2.bf16.msra.mxu0 0
      %1060 = vmatprep.subr.bf16.mxu0 0
      %1061 = vmatpush2.bf16.msra.mxu0 0
      %1062 = vmatprep.subr.bf16.mxu0 0
      %1063 = vmatpush2.bf16.msra.mxu0 0
      %1064 = vmatprep.subr.bf16.mxu0 0
      %1065 = vmatpush2.bf16.msra.mxu0 0
      %1066 = vmatprep.subr.bf16.mxu0 0
      %1067 = vmatpush2.bf16.msra.mxu0 0
      %1068 = vmatprep.subr.bf16.mxu0 0
      %1069 = vmatpush2.bf16.msra.mxu0 0
      %1070 = vmatprep.subr.bf16.mxu0 0
      %1071 = vmatpush2.bf16.msra.mxu0 0
      %1072 = vmatprep.mubr.bf16.mxu0 0
      %1073 = vmatmul.mubr.bf16.gmra.mxu0 %v997
      %v1074 = vpop.f32.mrf.mxu0
      %v1075 = vadd.f32 0.0, %v1074
      %v1076 = vpop.f32.mrf.mxu0
      %v1077 = vadd.f32 0.0, %v1076
      %v1078 = vpop.f32.mrf.mxu0
      %v1079 = vpop.f32.mrf.mxu0
      %1080 = vdwg.mxu0
      %v1085 = vrot.slane %v1034, 2
      %v1086 = vrot.slane %v1036, 2
      %v1087 = vrot.slane %v1075, 2
      %v1088 = vrot.slane %v1077, 2
      %v1093 = vadd.f32 %v991, %v1085
      %v1094 = vadd.f32 %v992, %v1086
      %v1095 = vadd.f32 %v993, %v1087
      %v1096 = vadd.f32 %v994, %v1088
      %v1097 = vxor.u32 %v1093, 2147483648
      %v1098 = vxor.u32 %v1094, 2147483648
      %v1099 = vxor.u32 %v1095, 2147483648
      %v1100 = vmul.f32 %v1097, 1.442695
      %v1101 = vpow.pop %v1100
      %v1102 = vmul.f32 %v1098, 1.442695
      %v1103 = vpow.pop %v1102
      %v1104 = vmul.f32 %v1099, 1.442695
      %v1105 = vpow.pop %v1104
      %v1106 = vadd.f32 %v1101, 1.0
      %v1107 = vadd.f32 %v1103, 1.0
      %v1108 = vadd.f32 %v1105, 1.0
      %v1109 = vrcp.pop %v1106
      %v1110 = vmul.f32 1.0, %v1109
      %v1111 = vrcp.pop %v1107
      %v1112 = vmul.f32 1.0, %v1111
      %v1113 = vrcp.pop %v1108
      %v1114 = vmul.f32 1.0, %v1113
      %v1115 = vtanh.pop %v1096
      %v1117 = vrot.slane %v987, 6
      %v1119 = vmul.f32 %v1112, %v1117
      %v1120 = vmul.f32 %v1110, %v1115
      %v1121 = vadd.f32 %v1119, %v1120
      %v1122 = vtanh.pop %v1121
      %v1123 = vmul.f32 %v1114, %v1122
      %1124 = vst [vmem:[#allocation2] sm:$0xc0] %v1123
      %v1125 = vld [vmem:[#allocation3 + $0x20] sm:$0x3]
      %v1126 = vld [vmem:[#allocation3 + $0x28] sm:$0x3]
      %v1127 = vld [vmem:[#allocation3 + $0x30] sm:$0x3]
      %v1128 = vld [vmem:[#allocation3 + $0x38] sm:$0x3]
      %v1129 = vpack.c.bf16 %v1123, %v1123
      %v1131 = vrot.slane %v1129, 3
      %1133 = vmatprep.subr.bf16.mxu0 %v580
      %1134 = vmatpush1.bf16.msra.mxu0 %v579
      %1135 = vmatprep.subr.bf16.mxu0 %v576
      %1136 = vmatpush1.bf16.msra.mxu0 %v575
      %1137 = vmatprep.subr.bf16.mxu0 %v572
      %1138 = vmatpush1.bf16.msra.mxu0 %v571
      %1139 = vmatprep.subr.bf16.mxu0 %v568
      %1140 = vmatpush1.bf16.msra.mxu0 %v567
      %1141 = vmatprep.subr.bf16.mxu0 %v564
      %1142 = vmatpush1.bf16.msra.mxu0 %v563
      %1143 = vmatprep.subr.bf16.mxu0 %v560
      %1144 = vmatpush1.bf16.msra.mxu0 %v559
      %1145 = vmatprep.subr.bf16.mxu0 %v556
      %1146 = vmatpush1.bf16.msra.mxu0 %v555
      %1147 = vmatprep.subr.bf16.mxu0 %v552
      %1148 = vmatpush1.bf16.msra.mxu0 %v551
      %1149 = vmatprep.subr.bf16.mxu0 0
      %1150 = vmatpush2.bf16.msra.mxu0 0
      %1151 = vmatprep.subr.bf16.mxu0 0
      %1152 = vmatpush2.bf16.msra.mxu0 0
      %1153 = vmatprep.subr.bf16.mxu0 0
      %1154 = vmatpush2.bf16.msra.mxu0 0
      %1155 = vmatprep.subr.bf16.mxu0 0
      %1156 = vmatpush2.bf16.msra.mxu0 0
      %1157 = vmatprep.subr.bf16.mxu0 0
      %1158 = vmatpush2.bf16.msra.mxu0 0
      %1159 = vmatprep.subr.bf16.mxu0 0
      %1160 = vmatpush2.bf16.msra.mxu0 0
      %1161 = vmatprep.subr.bf16.mxu0 0
      %1162 = vmatpush2.bf16.msra.mxu0 0
      %1163 = vmatprep.subr.bf16.mxu0 0
      %1164 = vmatpush2.bf16.msra.mxu0 0
      %1165 = vmatprep.mubr.bf16.mxu0 0
      %1166 = vmatmul.mubr.bf16.gmra.mxu0 %v1131
      %v1167 = vpop.f32.mrf.mxu0
      %v1168 = vadd.f32 0.0, %v1167
      %v1169 = vpop.f32.mrf.mxu0
      %v1170 = vadd.f32 0.0, %v1169
      %v1171 = vpop.f32.mrf.mxu0
      %v1172 = vpop.f32.mrf.mxu0
      %1173 = vdwg.mxu0
      %1174 = vmatprep.subr.bf16.mxu0 %v582
      %1175 = vmatpush1.bf16.msra.mxu0 %v581
      %1176 = vmatprep.subr.bf16.mxu0 %v578
      %1177 = vmatpush1.bf16.msra.mxu0 %v577
      %1178 = vmatprep.subr.bf16.mxu0 %v574
      %1179 = vmatpush1.bf16.msra.mxu0 %v573
      %1180 = vmatprep.subr.bf16.mxu0 %v570
      %1181 = vmatpush1.bf16.msra.mxu0 %v569
      %1182 = vmatprep.subr.bf16.mxu0 %v566
      %1183 = vmatpush1.bf16.msra.mxu0 %v565
      %1184 = vmatprep.subr.bf16.mxu0 %v562
      %1185 = vmatpush1.bf16.msra.mxu0 %v561
      %1186 = vmatprep.subr.bf16.mxu0 %v558
      %1187 = vmatpush1.bf16.msra.mxu0 %v557
      %1188 = vmatprep.subr.bf16.mxu0 %v554
      %1189 = vmatpush1.bf16.msra.mxu0 %v553
      %1190 = vmatprep.subr.bf16.mxu0 0
      %1191 = vmatpush2.bf16.msra.mxu0 0
      %1192 = vmatprep.subr.bf16.mxu0 0
      %1193 = vmatpush2.bf16.msra.mxu0 0
      %1194 = vmatprep.subr.bf16.mxu0 0
      %1195 = vmatpush2.bf16.msra.mxu0 0
      %1196 = vmatprep.subr.bf16.mxu0 0
      %1197 = vmatpush2.bf16.msra.mxu0 0
      %1198 = vmatprep.subr.bf16.mxu0 0
      %1199 = vmatpush2.bf16.msra.mxu0 0
      %1200 = vmatprep.subr.bf16.mxu0 0
      %1201 = vmatpush2.bf16.msra.mxu0 0
      %1202 = vmatprep.subr.bf16.mxu0 0
      %1203 = vmatpush2.bf16.msra.mxu0 0
      %1204 = vmatprep.subr.bf16.mxu0 0
      %1205 = vmatpush2.bf16.msra.mxu0 0
      %1206 = vmatprep.mubr.bf16.mxu0 0
      %1207 = vmatmul.mubr.bf16.gmra.mxu0 %v1131
      %v1208 = vpop.f32.mrf.mxu0
      %v1209 = vadd.f32 0.0, %v1208
      %v1210 = vpop.f32.mrf.mxu0
      %v1211 = vadd.f32 0.0, %v1210
      %v1212 = vpop.f32.mrf.mxu0
      %v1213 = vpop.f32.mrf.mxu0
      %1214 = vdwg.mxu0
      %v1215 = vadd.f32 %v1125, %v1168
      %v1216 = vadd.f32 %v1126, %v1170
      %v1217 = vadd.f32 %v1127, %v1209
      %v1218 = vadd.f32 %v1128, %v1211
      %v1219 = vxor.u32 %v1215, 2147483648
      %v1220 = vxor.u32 %v1216, 2147483648
      %v1221 = vxor.u32 %v1217, 2147483648
      %v1222 = vmul.f32 %v1219, 1.442695
      %v1223 = vpow.pop %v1222
      %v1224 = vmul.f32 %v1220, 1.442695
      %v1225 = vpow.pop %v1224
      %v1226 = vmul.f32 %v1221, 1.442695
      %v1227 = vpow.pop %v1226
      %v1228 = vadd.f32 %v1223, 1.0
      %v1229 = vadd.f32 %v1225, 1.0
      %v1230 = vadd.f32 %v1227, 1.0
      %v1231 = vrcp.pop %v1228
      %v1232 = vmul.f32 1.0, %v1231
      %v1233 = vrcp.pop %v1229
      %v1234 = vmul.f32 1.0, %v1233
      %v1235 = vrcp.pop %v1230
      %v1236 = vmul.f32 1.0, %v1235
      %v1237 = vtanh.pop %v1218
      %v1239 = vrot.slane %v1121, 6
      %v1241 = vmul.f32 %v1234, %v1239
      %v1242 = vmul.f32 %v1232, %v1237
      %v1243 = vadd.f32 %v1241, %v1242
      %v1244 = vtanh.pop %v1243
      %v1245 = vmul.f32 %v1236, %v1244
      %1246 = vst [vmem:[#allocation2 + $0x8] sm:$0x3] %v1245
      %v1247 = vld [vmem:[#allocation3 + $0x20] sm:$0xc]
      %v1248 = vld [vmem:[#allocation3 + $0x28] sm:$0xc]
      %v1249 = vld [vmem:[#allocation3 + $0x30] sm:$0xc]
      %v1250 = vld [vmem:[#allocation3 + $0x38] sm:$0xc]
      %v1251 = vpack.c.bf16 %v1245, %v1245
      %1252 = vmatprep.subr.bf16.mxu0 %v580
      %1253 = vmatpush1.bf16.msra.mxu0 %v579
      %1254 = vmatprep.subr.bf16.mxu0 %v576
      %1255 = vmatpush1.bf16.msra.mxu0 %v575
      %1256 = vmatprep.subr.bf16.mxu0 %v572
      %1257 = vmatpush1.bf16.msra.mxu0 %v571
      %1258 = vmatprep.subr.bf16.mxu0 %v568
      %1259 = vmatpush1.bf16.msra.mxu0 %v567
      %1260 = vmatprep.subr.bf16.mxu0 %v564
      %1261 = vmatpush1.bf16.msra.mxu0 %v563
      %1262 = vmatprep.subr.bf16.mxu0 %v560
      %1263 = vmatpush1.bf16.msra.mxu0 %v559
      %1264 = vmatprep.subr.bf16.mxu0 %v556
      %1265 = vmatpush1.bf16.msra.mxu0 %v555
      %1266 = vmatprep.subr.bf16.mxu0 %v552
      %1267 = vmatpush1.bf16.msra.mxu0 %v551
      %1268 = vmatprep.subr.bf16.mxu0 0
      %1269 = vmatpush2.bf16.msra.mxu0 0
      %1270 = vmatprep.subr.bf16.mxu0 0
      %1271 = vmatpush2.bf16.msra.mxu0 0
      %1272 = vmatprep.subr.bf16.mxu0 0
      %1273 = vmatpush2.bf16.msra.mxu0 0
      %1274 = vmatprep.subr.bf16.mxu0 0
      %1275 = vmatpush2.bf16.msra.mxu0 0
      %1276 = vmatprep.subr.bf16.mxu0 0
      %1277 = vmatpush2.bf16.msra.mxu0 0
      %1278 = vmatprep.subr.bf16.mxu0 0
      %1279 = vmatpush2.bf16.msra.mxu0 0
      %1280 = vmatprep.subr.bf16.mxu0 0
      %1281 = vmatpush2.bf16.msra.mxu0 0
      %1282 = vmatprep.subr.bf16.mxu0 0
      %1283 = vmatpush2.bf16.msra.mxu0 0
      %1284 = vmatprep.mubr.bf16.mxu0 0
      %1285 = vmatmul.mubr.bf16.gmra.mxu0 %v1251
      %v1286 = vpop.f32.mrf.mxu0
      %v1287 = vadd.f32 0.0, %v1286
      %v1288 = vpop.f32.mrf.mxu0
      %v1289 = vadd.f32 0.0, %v1288
      %v1290 = vpop.f32.mrf.mxu0
      %v1291 = vpop.f32.mrf.mxu0
      %1292 = vdwg.mxu0
      %1293 = vmatprep.subr.bf16.mxu0 %v582
      %1294 = vmatpush1.bf16.msra.mxu0 %v581
      %1295 = vmatprep.subr.bf16.mxu0 %v578
      %1296 = vmatpush1.bf16.msra.mxu0 %v577
      %1297 = vmatprep.subr.bf16.mxu0 %v574
      %1298 = vmatpush1.bf16.msra.mxu0 %v573
      %1299 = vmatprep.subr.bf16.mxu0 %v570
      %1300 = vmatpush1.bf16.msra.mxu0 %v569
      %1301 = vmatprep.subr.bf16.mxu0 %v566
      %1302 = vmatpush1.bf16.msra.mxu0 %v565
      %1303 = vmatprep.subr.bf16.mxu0 %v562
      %1304 = vmatpush1.bf16.msra.mxu0 %v561
      %1305 = vmatprep.subr.bf16.mxu0 %v558
      %1306 = vmatpush1.bf16.msra.mxu0 %v557
      %1307 = vmatprep.subr.bf16.mxu0 %v554
      %1308 = vmatpush1.bf16.msra.mxu0 %v553
      %1309 = vmatprep.subr.bf16.mxu0 0
      %1310 = vmatpush2.bf16.msra.mxu0 0
      %1311 = vmatprep.subr.bf16.mxu0 0
      %1312 = vmatpush2.bf16.msra.mxu0 0
      %1313 = vmatprep.subr.bf16.mxu0 0
      %1314 = vmatpush2.bf16.msra.mxu0 0
      %1315 = vmatprep.subr.bf16.mxu0 0
      %1316 = vmatpush2.bf16.msra.mxu0 0
      %1317 = vmatprep.subr.bf16.mxu0 0
      %1318 = vmatpush2.bf16.msra.mxu0 0
      %1319 = vmatprep.subr.bf16.mxu0 0
      %1320 = vmatpush2.bf16.msra.mxu0 0
      %1321 = vmatprep.subr.bf16.mxu0 0
      %1322 = vmatpush2.bf16.msra.mxu0 0
      %1323 = vmatprep.subr.bf16.mxu0 0
      %1324 = vmatpush2.bf16.msra.mxu0 0
      %1325 = vmatprep.mubr.bf16.mxu0 0
      %1326 = vmatmul.mubr.bf16.gmra.mxu0 %v1251
      %v1327 = vpop.f32.mrf.mxu0
      %v1328 = vadd.f32 0.0, %v1327
      %v1329 = vpop.f32.mrf.mxu0
      %v1330 = vadd.f32 0.0, %v1329
      %v1331 = vpop.f32.mrf.mxu0
      %v1332 = vpop.f32.mrf.mxu0
      %1333 = vdwg.mxu0
      %v1338 = vrot.slane %v1287, 6
      %v1339 = vrot.slane %v1289, 6
      %v1340 = vrot.slane %v1328, 6
      %v1341 = vrot.slane %v1330, 6
      %v1346 = vadd.f32 %v1247, %v1338
      %v1347 = vadd.f32 %v1248, %v1339
      %v1348 = vadd.f32 %v1249, %v1340
      %v1349 = vadd.f32 %v1250, %v1341
      %v1350 = vxor.u32 %v1346, 2147483648
      %v1351 = vxor.u32 %v1347, 2147483648
      %v1352 = vxor.u32 %v1348, 2147483648
      %v1353 = vmul.f32 %v1350, 1.442695
      %v1354 = vpow.pop %v1353
      %v1355 = vmul.f32 %v1351, 1.442695
      %v1356 = vpow.pop %v1355
      %v1357 = vmul.f32 %v1352, 1.442695
      %v1358 = vpow.pop %v1357
      %v1359 = vadd.f32 %v1354, 1.0
      %v1360 = vadd.f32 %v1356, 1.0
      %v1361 = vadd.f32 %v1358, 1.0
      %v1362 = vrcp.pop %v1359
      %v1363 = vmul.f32 1.0, %v1362
      %v1364 = vrcp.pop %v1360
      %v1365 = vmul.f32 1.0, %v1364
      %v1366 = vrcp.pop %v1361
      %v1367 = vmul.f32 1.0, %v1366
      %v1368 = vtanh.pop %v1349
      %v1370 = vrot.slane %v1243, 6
      %v1372 = vmul.f32 %v1365, %v1370
      %v1373 = vmul.f32 %v1363, %v1368
      %v1374 = vadd.f32 %v1372, %v1373
      %v1375 = vtanh.pop %v1374
      %v1376 = vmul.f32 %v1367, %v1375
      %1377 = vst [vmem:[#allocation2 + $0x8] sm:$0xc] %v1376
      %v1378 = vld [vmem:[#allocation3 + $0x20] sm:$0x30]
      %v1379 = vld [vmem:[#allocation3 + $0x28] sm:$0x30]
      %v1380 = vld [vmem:[#allocation3 + $0x30] sm:$0x30]
      %v1381 = vld [vmem:[#allocation3 + $0x38] sm:$0x30]
      %v1382 = vpack.c.bf16 %v1376, %v1376
      %v1384 = vrot.slane %v1382, 1
      %1386 = vmatprep.subr.bf16.mxu0 %v580
      %1387 = vmatpush1.bf16.msra.mxu0 %v579
      %1388 = vmatprep.subr.bf16.mxu0 %v576
      %1389 = vmatpush1.bf16.msra.mxu0 %v575
      %1390 = vmatprep.subr.bf16.mxu0 %v572
      %1391 = vmatpush1.bf16.msra.mxu0 %v571
      %1392 = vmatprep.subr.bf16.mxu0 %v568
      %1393 = vmatpush1.bf16.msra.mxu0 %v567
      %1394 = vmatprep.subr.bf16.mxu0 %v564
      %1395 = vmatpush1.bf16.msra.mxu0 %v563
      %1396 = vmatprep.subr.bf16.mxu0 %v560
      %1397 = vmatpush1.bf16.msra.mxu0 %v559
      %1398 = vmatprep.subr.bf16.mxu0 %v556
      %1399 = vmatpush1.bf16.msra.mxu0 %v555
      %1400 = vmatprep.subr.bf16.mxu0 %v552
      %1401 = vmatpush1.bf16.msra.mxu0 %v551
      %1402 = vmatprep.subr.bf16.mxu0 0
      %1403 = vmatpush2.bf16.msra.mxu0 0
      %1404 = vmatprep.subr.bf16.mxu0 0
      %1405 = vmatpush2.bf16.msra.mxu0 0
      %1406 = vmatprep.subr.bf16.mxu0 0
      %1407 = vmatpush2.bf16.msra.mxu0 0
      %1408 = vmatprep.subr.bf16.mxu0 0
      %1409 = vmatpush2.bf16.msra.mxu0 0
      %1410 = vmatprep.subr.bf16.mxu0 0
      %1411 = vmatpush2.bf16.msra.mxu0 0
      %1412 = vmatprep.subr.bf16.mxu0 0
      %1413 = vmatpush2.bf16.msra.mxu0 0
      %1414 = vmatprep.subr.bf16.mxu0 0
      %1415 = vmatpush2.bf16.msra.mxu0 0
      %1416 = vmatprep.subr.bf16.mxu0 0
      %1417 = vmatpush2.bf16.msra.mxu0 0
      %1418 = vmatprep.mubr.bf16.mxu0 0
      %1419 = vmatmul.mubr.bf16.gmra.mxu0 %v1384
      %v1420 = vpop.f32.mrf.mxu0
      %v1421 = vadd.f32 0.0, %v1420
      %v1422 = vpop.f32.mrf.mxu0
      %v1423 = vadd.f32 0.0, %v1422
      %v1424 = vpop.f32.mrf.mxu0
      %v1425 = vpop.f32.mrf.mxu0
      %1426 = vdwg.mxu0
      %1427 = vmatprep.subr.bf16.mxu0 %v582
      %1428 = vmatpush1.bf16.msra.mxu0 %v581
      %1429 = vmatprep.subr.bf16.mxu0 %v578
      %1430 = vmatpush1.bf16.msra.mxu0 %v577
      %1431 = vmatprep.subr.bf16.mxu0 %v574
      %1432 = vmatpush1.bf16.msra.mxu0 %v573
      %1433 = vmatprep.subr.bf16.mxu0 %v570
      %1434 = vmatpush1.bf16.msra.mxu0 %v569
      %1435 = vmatprep.subr.bf16.mxu0 %v566
      %1436 = vmatpush1.bf16.msra.mxu0 %v565
      %1437 = vmatprep.subr.bf16.mxu0 %v562
      %1438 = vmatpush1.bf16.msra.mxu0 %v561
      %1439 = vmatprep.subr.bf16.mxu0 %v558
      %1440 = vmatpush1.bf16.msra.mxu0 %v557
      %1441 = vmatprep.subr.bf16.mxu0 %v554
      %1442 = vmatpush1.bf16.msra.mxu0 %v553
      %1443 = vmatprep.subr.bf16.mxu0 0
      %1444 = vmatpush2.bf16.msra.mxu0 0
      %1445 = vmatprep.subr.bf16.mxu0 0
      %1446 = vmatpush2.bf16.msra.mxu0 0
      %1447 = vmatprep.subr.bf16.mxu0 0
      %1448 = vmatpush2.bf16.msra.mxu0 0
      %1449 = vmatprep.subr.bf16.mxu0 0
      %1450 = vmatpush2.bf16.msra.mxu0 0
      %1451 = vmatprep.subr.bf16.mxu0 0
      %1452 = vmatpush2.bf16.msra.mxu0 0
      %1453 = vmatprep.subr.bf16.mxu0 0
      %1454 = vmatpush2.bf16.msra.mxu0 0
      %1455 = vmatprep.subr.bf16.mxu0 0
      %1456 = vmatpush2.bf16.msra.mxu0 0
      %1457 = vmatprep.subr.bf16.mxu0 0
      %1458 = vmatpush2.bf16.msra.mxu0 0
      %1459 = vmatprep.mubr.bf16.mxu0 0
      %1460 = vmatmul.mubr.bf16.gmra.mxu0 %v1384
      %v1461 = vpop.f32.mrf.mxu0
      %v1462 = vadd.f32 0.0, %v1461
      %v1463 = vpop.f32.mrf.mxu0
      %v1464 = vadd.f32 0.0, %v1463
      %v1465 = vpop.f32.mrf.mxu0
      %v1466 = vpop.f32.mrf.mxu0
      %1467 = vdwg.mxu0
      %v1472 = vrot.slane %v1421, 4
      %v1473 = vrot.slane %v1423, 4
      %v1474 = vrot.slane %v1462, 4
      %v1475 = vrot.slane %v1464, 4
      %v1480 = vadd.f32 %v1378, %v1472
      %v1481 = vadd.f32 %v1379, %v1473
      %v1482 = vadd.f32 %v1380, %v1474
      %v1483 = vadd.f32 %v1381, %v1475
      %v1484 = vxor.u32 %v1480, 2147483648
      %v1485 = vxor.u32 %v1481, 2147483648
      %v1486 = vxor.u32 %v1482, 2147483648
      %v1487 = vmul.f32 %v1484, 1.442695
      %v1488 = vpow.pop %v1487
      %v1489 = vmul.f32 %v1485, 1.442695
      %v1490 = vpow.pop %v1489
      %v1491 = vmul.f32 %v1486, 1.442695
      %v1492 = vpow.pop %v1491
      %v1493 = vadd.f32 %v1488, 1.0
      %v1494 = vadd.f32 %v1490, 1.0
      %v1495 = vadd.f32 %v1492, 1.0
      %v1496 = vrcp.pop %v1493
      %v1497 = vmul.f32 1.0, %v1496
      %v1498 = vrcp.pop %v1494
      %v1499 = vmul.f32 1.0, %v1498
      %v1500 = vrcp.pop %v1495
      %v1501 = vmul.f32 1.0, %v1500
      %v1502 = vtanh.pop %v1483
      %v1504 = vrot.slane %v1374, 6
      %v1506 = vmul.f32 %v1499, %v1504
      %v1507 = vmul.f32 %v1497, %v1502
      %v1508 = vadd.f32 %v1506, %v1507
      %v1509 = vtanh.pop %v1508
      %v1510 = vmul.f32 %v1501, %v1509
      %1511 = vst [vmem:[#allocation2 + $0x8] sm:$0x30] %v1510
      %v1512 = vld [vmem:[#allocation3 + $0x20] sm:$0xc0]
      %v1513 = vld [vmem:[#allocation3 + $0x28] sm:$0xc0]
      %v1514 = vld [vmem:[#allocation3 + $0x30] sm:$0xc0]
      %v1515 = vld [vmem:[#allocation3 + $0x38] sm:$0xc0]
      %v1516 = vpack.c.bf16 %v1510, %v1510
      %v1518 = vrot.slane %v1516, 2
      %1520 = vmatprep.subr.bf16.mxu0 %v580
      %1521 = vmatpush1.bf16.msra.mxu0 %v579
      %1522 = vmatprep.subr.bf16.mxu0 %v576
      %1523 = vmatpush1.bf16.msra.mxu0 %v575
      %1524 = vmatprep.subr.bf16.mxu0 %v572
      %1525 = vmatpush1.bf16.msra.mxu0 %v571
      %1526 = vmatprep.subr.bf16.mxu0 %v568
      %1527 = vmatpush1.bf16.msra.mxu0 %v567
      %1528 = vmatprep.subr.bf16.mxu0 %v564
      %1529 = vmatpush1.bf16.msra.mxu0 %v563
      %1530 = vmatprep.subr.bf16.mxu0 %v560
      %1531 = vmatpush1.bf16.msra.mxu0 %v559
      %1532 = vmatprep.subr.bf16.mxu0 %v556
      %1533 = vmatpush1.bf16.msra.mxu0 %v555
      %1534 = vmatprep.subr.bf16.mxu0 %v552
      %1535 = vmatpush1.bf16.msra.mxu0 %v551
      %1536 = vmatprep.subr.bf16.mxu0 0
      %1537 = vmatpush2.bf16.msra.mxu0 0
      %1538 = vmatprep.subr.bf16.mxu0 0
      %1539 = vmatpush2.bf16.msra.mxu0 0
      %1540 = vmatprep.subr.bf16.mxu0 0
      %1541 = vmatpush2.bf16.msra.mxu0 0
      %1542 = vmatprep.subr.bf16.mxu0 0
      %1543 = vmatpush2.bf16.msra.mxu0 0
      %1544 = vmatprep.subr.bf16.mxu0 0
      %1545 = vmatpush2.bf16.msra.mxu0 0
      %1546 = vmatprep.subr.bf16.mxu0 0
      %1547 = vmatpush2.bf16.msra.mxu0 0
      %1548 = vmatprep.subr.bf16.mxu0 0
      %1549 = vmatpush2.bf16.msra.mxu0 0
      %1550 = vmatprep.subr.bf16.mxu0 0
      %1551 = vmatpush2.bf16.msra.mxu0 0
      %1552 = vmatprep.mubr.bf16.mxu0 0
      %1553 = vmatmul.mubr.bf16.gmra.mxu0 %v1518
      %v1554 = vpop.f32.mrf.mxu0
      %v1555 = vadd.f32 0.0, %v1554
      %v1556 = vpop.f32.mrf.mxu0
      %v1557 = vadd.f32 0.0, %v1556
      %v1558 = vpop.f32.mrf.mxu0
      %v1559 = vpop.f32.mrf.mxu0
      %1560 = vdwg.mxu0
      %1561 = vmatprep.subr.bf16.mxu0 %v582
      %1562 = vmatpush1.bf16.msra.mxu0 %v581
      %1563 = vmatprep.subr.bf16.mxu0 %v578
      %1564 = vmatpush1.bf16.msra.mxu0 %v577
      %1565 = vmatprep.subr.bf16.mxu0 %v574
      %1566 = vmatpush1.bf16.msra.mxu0 %v573
      %1567 = vmatprep.subr.bf16.mxu0 %v570
      %1568 = vmatpush1.bf16.msra.mxu0 %v569
      %1569 = vmatprep.subr.bf16.mxu0 %v566
      %1570 = vmatpush1.bf16.msra.mxu0 %v565
      %1571 = vmatprep.subr.bf16.mxu0 %v562
      %1572 = vmatpush1.bf16.msra.mxu0 %v561
      %1573 = vmatprep.subr.bf16.mxu0 %v558
      %1574 = vmatpush1.bf16.msra.mxu0 %v557
      %1575 = vmatprep.subr.bf16.mxu0 %v554
      %1576 = vmatpush1.bf16.msra.mxu0 %v553
      %1577 = vmatprep.subr.bf16.mxu0 0
      %1578 = vmatpush2.bf16.msra.mxu0 0
      %1579 = vmatprep.subr.bf16.mxu0 0
      %1580 = vmatpush2.bf16.msra.mxu0 0
      %1581 = vmatprep.subr.bf16.mxu0 0
      %1582 = vmatpush2.bf16.msra.mxu0 0
      %1583 = vmatprep.subr.bf16.mxu0 0
      %1584 = vmatpush2.bf16.msra.mxu0 0
      %1585 = vmatprep.subr.bf16.mxu0 0
      %1586 = vmatpush2.bf16.msra.mxu0 0
      %1587 = vmatprep.subr.bf16.mxu0 0
      %1588 = vmatpush2.bf16.msra.mxu0 0
      %1589 = vmatprep.subr.bf16.mxu0 0
      %1590 = vmatpush2.bf16.msra.mxu0 0
      %1591 = vmatprep.subr.bf16.mxu0 0
      %1592 = vmatpush2.bf16.msra.mxu0 0
      %1593 = vmatprep.mubr.bf16.mxu0 0
      %1594 = vmatmul.mubr.bf16.gmra.mxu0 %v1518
      %v1595 = vpop.f32.mrf.mxu0
      %v1596 = vadd.f32 0.0, %v1595
      %v1597 = vpop.f32.mrf.mxu0
      %v1598 = vadd.f32 0.0, %v1597
      %v1599 = vpop.f32.mrf.mxu0
      %v1600 = vpop.f32.mrf.mxu0
      %1601 = vdwg.mxu0
      %v1606 = vrot.slane %v1555, 2
      %v1607 = vrot.slane %v1557, 2
      %v1608 = vrot.slane %v1596, 2
      %v1609 = vrot.slane %v1598, 2
      %v1614 = vadd.f32 %v1512, %v1606
      %v1615 = vadd.f32 %v1513, %v1607
      %v1616 = vadd.f32 %v1514, %v1608
      %v1617 = vadd.f32 %v1515, %v1609
      %v1618 = vxor.u32 %v1614, 2147483648
      %v1619 = vxor.u32 %v1615, 2147483648
      %v1620 = vxor.u32 %v1616, 2147483648
      %v1621 = vmul.f32 %v1618, 1.442695
      %v1622 = vpow.pop %v1621
      %v1623 = vmul.f32 %v1619, 1.442695
      %v1624 = vpow.pop %v1623
      %v1625 = vmul.f32 %v1620, 1.442695
      %v1626 = vpow.pop %v1625
      %v1627 = vadd.f32 %v1622, 1.0
      %v1628 = vadd.f32 %v1624, 1.0
      %v1629 = vadd.f32 %v1626, 1.0
      %v1630 = vrcp.pop %v1627
      %v1631 = vmul.f32 1.0, %v1630
      %v1632 = vrcp.pop %v1628
      %v1633 = vmul.f32 1.0, %v1632
      %v1634 = vrcp.pop %v1629
      %v1635 = vmul.f32 1.0, %v1634
      %v1636 = vtanh.pop %v1617
      %v1638 = vrot.slane %v1508, 6
      %v1640 = vmul.f32 %v1633, %v1638
      %v1641 = vmul.f32 %v1631, %v1636
      %v1642 = vadd.f32 %v1640, %v1641
      %v1643 = vtanh.pop %v1642
      %v1644 = vmul.f32 %v1635, %v1643
      %1645 = vst [vmem:[#allocation2 + $0x8] sm:$0xc0] %v1644
    $region50: #{tpu_custom_call.1} parent=1 // loop_footer
      %s100 = sadd.s32 1, %s96
    $region51: #{tpu_custom_call.1} parent=1 // loop_footer_branch
      %95 = sbr.rel target = $region47
    $region52: #{tpu_custom_call.1} parent=1 // loop_exit
      _
    %v1646 = vld [vmem:[#allocation2 + $0xe] sm:$0x3]
    %v1647 = vld [vmem:[%s4] sm:$0xff]
    %v1648 = vld [vmem:[%s4 + $0x8] sm:$0xff]
    %v1649 = vld [vmem:[%s4 + $0x10] sm:$0xff]
    %v1650 = vld [vmem:[%s4 + $0x18] sm:$0xff]
    %v1651 = vld [vmem:[%s4 + $0x20] sm:$0xff]
    %v1652 = vld [vmem:[%s4 + $0x28] sm:$0xff]
    %v1653 = vld [vmem:[%s4 + $0x30] sm:$0xff]
    %v1654 = vld [vmem:[%s4 + $0x38] sm:$0xff]
    %v1655 = vld [vmem:[%s4 + $0x40] sm:$0xff]
    %v1656 = vld [vmem:[%s4 + $0x48] sm:$0xff]
    %v1657 = vld [vmem:[%s4 + $0x50] sm:$0xff]
    %v1658 = vld [vmem:[%s4 + $0x58] sm:$0xff]
    %v1659 = vld [vmem:[%s4 + $0x60] sm:$0xff]
    %v1660 = vld [vmem:[%s4 + $0x68] sm:$0xff]
    %v1661 = vld [vmem:[%s4 + $0x70] sm:$0xff]
    %v1662 = vld [vmem:[%s4 + $0x78] sm:$0xff]
    %v1663 = vld [vmem:[#allocation12] sm:$0x1]
    %v1665 = vlaneseq
    %v1666 = vshrl.u32 %v1665, 7
    %v1667 = vsub.s32 0, %v1666
    %v1668 = vrot.slane %v1663, %v1667
    %1670 = vmatprep.subr.mxu0 0.0
    %1671 = vmatpush1.msra.mxu0 %v1662
    %1672 = vmatprep.subr.mxu0 0.0
    %1673 = vmatpush1.msra.mxu0 %v1661
    %1674 = vmatprep.subr.mxu0 0.0
    %1675 = vmatpush1.msra.mxu0 %v1660
    %1676 = vmatprep.subr.mxu0 0.0
    %1677 = vmatpush1.msra.mxu0 %v1659
    %1678 = vmatprep.subr.mxu0 0.0
    %1679 = vmatpush1.msra.mxu0 %v1658
    %1680 = vmatprep.subr.mxu0 0.0
    %1681 = vmatpush1.msra.mxu0 %v1657
    %1682 = vmatprep.subr.mxu0 0.0
    %1683 = vmatpush1.msra.mxu0 %v1656
    %1684 = vmatprep.subr.mxu0 0.0
    %1685 = vmatpush1.msra.mxu0 %v1655
    %1686 = vmatprep.subr.mxu0 0.0
    %1687 = vmatpush1.msra.mxu0 %v1654
    %1688 = vmatprep.subr.mxu0 0.0
    %1689 = vmatpush1.msra.mxu0 %v1653
    %1690 = vmatprep.subr.mxu0 0.0
    %1691 = vmatpush1.msra.mxu0 %v1652
    %1692 = vmatprep.subr.mxu0 0.0
    %1693 = vmatpush1.msra.mxu0 %v1651
    %1694 = vmatprep.subr.mxu0 0.0
    %1695 = vmatpush1.msra.mxu0 %v1650
    %1696 = vmatprep.subr.mxu0 0.0
    %1697 = vmatpush1.msra.mxu0 %v1649
    %1698 = vmatprep.subr.mxu0 0.0
    %1699 = vmatpush1.msra.mxu0 %v1648
    %1700 = vmatprep.subr.mxu0 0.0
    %1701 = vmatpush1.msra.mxu0 %v1647
    %1702 = vmatprep.subr.mxu0 0.0
    %1703 = vmatpush2.msra.mxu0 0.0
    %1704 = vmatprep.subr.mxu0 0.0
    %1705 = vmatpush2.msra.mxu0 0.0
    %1706 = vmatprep.subr.mxu0 0.0
    %1707 = vmatpush2.msra.mxu0 0.0
    %1708 = vmatprep.subr.mxu0 0.0
    %1709 = vmatpush2.msra.mxu0 0.0
    %1710 = vmatprep.subr.mxu0 0.0
    %1711 = vmatpush2.msra.mxu0 0.0
    %1712 = vmatprep.subr.mxu0 0.0
    %1713 = vmatpush2.msra.mxu0 0.0
    %1714 = vmatprep.subr.mxu0 0.0
    %1715 = vmatpush2.msra.mxu0 0.0
    %1716 = vmatprep.subr.mxu0 0.0
    %1717 = vmatpush2.msra.mxu0 0.0
    %1718 = vmatprep.subr.mxu0 0.0
    %1719 = vmatpush2.msra.mxu0 0.0
    %1720 = vmatprep.subr.mxu0 0.0
    %1721 = vmatpush2.msra.mxu0 0.0
    %1722 = vmatprep.subr.mxu0 0.0
    %1723 = vmatpush2.msra.mxu0 0.0
    %1724 = vmatprep.subr.mxu0 0.0
    %1725 = vmatpush2.msra.mxu0 0.0
    %1726 = vmatprep.subr.mxu0 0.0
    %1727 = vmatpush2.msra.mxu0 0.0
    %1728 = vmatprep.subr.mxu0 0.0
    %1729 = vmatpush2.msra.mxu0 0.0
    %1730 = vmatprep.subr.mxu0 0.0
    %1731 = vmatpush2.msra.mxu0 0.0
    %1732 = vmatprep.subr.mxu0 0.0
    %1733 = vmatpush2.msra.mxu0 0.0
    %1734 = vmatprep.mubr.f32.mxu0 0.0
    %1735 = vmatmul.mubr.f32.gmra.mxu0 %v1646
    %v1736 = vpop.f32.mrf.mxu0
    %v1737 = vadd.f32 %v1668, %v1736
    %v1738 = vpop.f32.mrf.mxu0
    %1739 = vdwg.mxu0
    %vm1740 = vcmask 25600
    %1741 = vst.msk [vmem:[#allocation13] sm:$0x3] %vm1740, %v1737
    // Predicated region
    $region53: #{tpu_custom_call.1} parent=1 // pred_check
      _
    $region54: #{tpu_custom_call.1} parent=1 // pred_check_branch
      %1743 = sbr.rel (0) target = $region56
    $region55: #{tpu_custom_call.1} parent=1 // pred_region
      %s1745 = ssub.s32 32, 32
      %1746 = vsyncadd [#allocation6], %s1745
      %s1748 = sshll.u32 [#allocation13], 4
      %s1749 = int_to_ptr.vmem [resolvable:$true] %s1748
      %1751 = dma.vmem_to_hbm [thread:$0]  %s1749, 32, %s6, [#allocation6]
    $region56: #{tpu_custom_call.1} parent=1 // pred_fallthru
      _
    // Predicated region
    $region57: #{tpu_custom_call.1} parent=1 // pred_check
      _
    $region58: #{tpu_custom_call.1} parent=1 // pred_check_branch
      %1753 = sbr.rel (0) target = $region60
    $region59: #{tpu_custom_call.1} parent=1 // pred_region
      %1754 = dma.done [#allocation6], 32
    $region60: #{tpu_custom_call.1} parent=1 // pred_fallthru
      _
    %1755 = vsyncpa [#allocation5], 1
    %1756 = vsyncpa [#allocation8], 1
    %1757 = vsyncpa [#allocation11], 1
    %1758 = vsyncpa [#allocation6], 1

</llo_original>
